<compile_context>
chip_gen: v6e
topology: v6e:2x2x1
jax: 0.10.0
libtpu: 0.0.40
codegen_flags: <defaults>
</compile_context>

<pallas_src>
import numpy as np
import jax
import jax.numpy as jnp
from jax import lax
from jax.experimental import pallas as pl
from jax.experimental.pallas import tpu as pltpu

EPS = float(np.finfo(np.float32).eps)   # matches torch forward's EPS
BN_EPS = 1e-5                           # nn.BatchNorm2d default eps
LANES = 128


def _head_kernel(x_ref, w1_ref, t1_ref, w2_ref, t2_ref, ws_ref, wxy_ref,
                 out_ref):
    """One (C, TS, 128) pixel tile -> (2R, TS, 128) merged kcos||ksin tile.

    x_ref: bf16 input tile (pixels on sublanes+lanes).  Weights are tiny SMEM
    arrays: w1/w2 (C, C) BN-folded conv weights, t1/t2 (C,) folded shifts,
    ws (C, R) scale weights, wxy (C, 2R) fused angle_x||angle_y weights.
    out_ref: bf16, rows [0:R) = kcos, rows [R:2R) = ksin.
    """
    C = x_ref.shape[0]
    R = ws_ref.shape[1]

    # Per-channel dense (TS, 128) slabs; all math in f32 on the VPU.
    x_slabs = [x_ref[i].astype(jnp.float32) for i in range(C)]

    def conv_bn_relu_norm(w_ref, t_ref):
        # 1x1 conv + folded BN/bias as scalar-weight FMA chains (MXU skipped:
        # a K=4 contraction would waste the systolic array and pay MRF latency).
        h = []
        for co in range(C):
            acc = x_slabs[0] * w_ref[0, co]
            for ci in range(1, C):
                acc = acc + x_slabs[ci] * w_ref[ci, co]
            h.append(jnp.maximum(acc + t_ref[co], 0.0))
        # channel-sum normalization (channel axis is the unrolled list)
        s = h[0]
        for co in range(1, C):
            s = s + h[co]
        inv = pl.reciprocal(s + EPS, approx=True)
        return [hc * inv for hc in h]

    h1 = conv_bn_relu_norm(w1_ref, t1_ref)      # pre_scale branch
    h2 = conv_bn_relu_norm(w2_ref, t2_ref)      # pre_angle branch

    def project(h, w_ref, col0, ncols):
        outs = []
        for r in range(ncols):
            acc = h[0] * w_ref[0, col0 + r]
            for ci in range(1, C):
                acc = acc + h[ci] * w_ref[ci, col0 + r]
            outs.append(acc)
        return outs

    z = project(h1, ws_ref, 0, R)               # scale logits   R x (TS,128)
    kcos = project(h2, wxy_ref, 0, R)           # angle_x
    ksin = project(h2, wxy_ref, R, R)           # angle_y

    for r in range(R):
        zr = z[r]
        # scale = 1 + softsign(z)
        scale = 1.0 + zr * pl.reciprocal(1.0 + jnp.abs(zr), approx=True)
        # knorm = (|k| + EPS) / (scale + EPS); k / knorm = k*(scale+EPS)/|k|.
        # Single EUP rsqrt replaces sqrt + add-eps + reciprocal.
        inv_mag = lax.rsqrt(kcos[r] * kcos[r] + ksin[r] * ksin[r] + EPS * EPS)
        factor = (scale + EPS) * inv_mag
        out_ref[r] = (kcos[r] * factor).astype(out_ref.dtype)
        out_ref[R + r] = (ksin[r] * factor).astype(out_ref.dtype)


def _pick_tiles(hw, n, *, ts_max=512, ts_align=16):
    """Return (s_pad, ts): padded sublane extent and sublane tile size.

    ts_max=512 -> 64K pixels / ~2.6 MiB double-buffered footprint per step
    (C=4, R=3, bf16 in / bf16 out): far under every generation's VMEM,
    including v7x's 64 MiB, while being large enough to amortize the ~0.35 us
    per-step pipeline overhead.
    """
    s = -(-hw // LANES)                    # ceil(HW / 128)
    if s <= ts_align:
        return s, s                        # full-extent block: always legal
    ts = min(ts_max, s)
    if n == 1:
        # keep >= 2 grid steps so both v7x TensorCores get work
        ts = min(ts, max(s // 2, ts_align))
    ts = max((ts // ts_align) * ts_align, ts_align)
    s_pad = -(-s // ts) * ts               # pad so the bounded tile divides
    return s_pad, ts


def transformer_head_forward(x_nchw, params, *, input_dtype=jnp.bfloat16,
                             out_dtype=jnp.bfloat16):
    N, C, H, W = x_nchw.shape
    R = params["ws"].shape[1]
    HW = H * W
    f32 = jnp.float32

    # Fold conv bias + eval-mode BN into a per-output-channel scale/shift:
    #   bn(x@w + b) = x@(w*s) + (b - m)*s + be,  s = g / sqrt(v + eps)
    def fold(w, b, g, be, m, v):
        s = g * lax.rsqrt(v + BN_EPS)                            # (C,)
        return (w * s[None, :]).astype(f32), ((b - m) * s + be).astype(f32)

    w1f, t1 = fold(params["w1"], params["b1"], params["g1"],
                   params["be1"], params["m1"], params["v1"])
    w2f, t2 = fold(params["w2"], params["b2"], params["g2"],
                   params["be2"], params["m2"], params["v2"])
    ws = params["ws"].astype(f32)
    wxy = jnp.concatenate([params["wx"], params["wy"]], axis=1).astype(f32)

    # Native layout: NCHW viewed as (N, C, HW); pixels go onto sublanes+lanes.
    s_pad, ts = _pick_tiles(HW, N)
    hw_pad = s_pad * LANES
    x3 = x_nchw.reshape(N, C, HW).astype(input_dtype)
    if hw_pad != HW:
        x3 = jnp.pad(x3, ((0, 0), (0, 0), (0, hw_pad - HW)))
    x4 = x3.reshape(N, C, s_pad, LANES)

    smem = pl.BlockSpec(memory_space=pltpu.MemorySpace.SMEM)   # tiny, resident
    in_specs = [
        pl.BlockSpec((None, C, ts, LANES), lambda n, s: (n, 0, s, 0)),
        smem, smem, smem, smem, smem, smem,                    # folded weights
    ]
    out_spec = pl.BlockSpec((None, 2 * R, ts, LANES), lambda n, s: (n, 0, s, 0))

    out = pl.pallas_call(
        _head_kernel,
        out_shape=jax.ShapeDtypeStruct((N, 2 * R, s_pad, LANES), out_dtype),
        grid=(N, s_pad // ts),
        in_specs=in_specs,
        out_specs=out_spec,
        compiler_params=pltpu.CompilerParams(
            dimension_semantics=("parallel", "parallel"),
            vmem_limit_bytes=32 * 1024 * 1024),
    )(x4, w1f, t1, w2f, t2, ws, wxy)

    out = out.reshape(N, 2 * R, hw_pad)[:, :, :HW]
    kcos = out[:, :R, :].reshape(N, R, H, W)
    ksin = out[:, R:, :].reshape(N, R, H, W)
    return kcos, ksin


def _reference_forward(x_nchw, p):
    """Pure-JAX reference (unfused math, exact divides, NCHW semantics)."""
    N, C, H, W = x_nchw.shape
    R = p["ws"].shape[1]
    x2d = jnp.transpose(x_nchw, (0, 2, 3, 1)).reshape(-1, C)

    def branch(w, b, g, be, m, v):
        h = x2d @ w + b
        h = (h - m) * (g / jnp.sqrt(v + BN_EPS)) + be
        h = jnp.maximum(h, 0.0)
        return h / (h.sum(-1, keepdims=True) + EPS)

    h1 = branch(p["w1"], p["b1"], p["g1"], p["be1"], p["m1"], p["v1"])
    z = h1 @ p["ws"]
    scale = 1.0 + z / (1.0 + jnp.abs(z))
    h2 = branch(p["w2"], p["b2"], p["g2"], p["be2"], p["m2"], p["v2"])
    kcos = h2 @ p["wx"]
    ksin = h2 @ p["wy"]
    knorm = jnp.sqrt(kcos ** 2 + ksin ** 2) + EPS
    knorm = knorm / (scale + EPS)
    back = lambda y: jnp.transpose(y.reshape(N, H, W, R), (0, 3, 1, 2))
    return back(kcos / knorm), back(ksin / knorm)


def make_params(key, num_channels, num_regress):
    C, R = num_channels, num_regress
    ks = jax.random.split(key, 15)
    f = jnp.float32
    n = lambda k, s: jax.random.normal(k, s, f)
    u = lambda k, s: jax.random.uniform(k, s, f)
    return {
        # conv weights stored as (C_in, C_out) so rows @ W applies the 1x1 conv
        "w1": 0.3 * n(ks[0], (C, C)), "b1": 0.1 * n(ks[1], (C,)),
        "g1": 1.0 + 0.1 * n(ks[2], (C,)), "be1": 0.1 * n(ks[3], (C,)),
        "m1": 0.05 * n(ks[4], (C,)), "v1": 1.0 + 0.1 * u(ks[5], (C,)),
        "w2": 0.3 * n(ks[6], (C, C)), "b2": 0.1 * n(ks[7], (C,)),
        "g2": 1.0 + 0.1 * n(ks[8], (C,)), "be2": 0.1 * n(ks[9], (C,)),
        "m2": 0.05 * n(ks[10], (C,)), "v2": 1.0 + 0.1 * u(ks[11], (C,)),
        "ws": 0.3 * n(ks[12], (C, R)),
        "wx": 0.3 * n(ks[13], (C, R)),
        "wy": 0.3 * n(ks[14], (C, R)),
    }


if __name__ == "__main__":
    key = jax.random.PRNGKey(0)
    N, C, H, W = 2, 4, 16, 16     # small shapes; H*W = 256 -> (S=2, 128) tiles
    R = 3                         # num_regress

    x = jax.random.normal(jax.random.fold_in(key, 1), (N, C, H, W), jnp.float32)
    params = make_params(jax.random.fold_in(key, 2), C, R)

    kcos, ksin = transformer_head_forward(x, params)
    kcos, ksin = jax.block_until_ready((kcos, ksin))

    # Reference consumes the same bf16-quantized input the kernel loads, so the
    # remaining divergence is approx (EUP) reciprocals/rsqrt, FMA order and the
    # bf16 output cast; outputs are O(1) in magnitude, tolerance is set
    # accordingly.
    x_q = x.astype(jnp.bfloat16).astype(jnp.float32)
    ref_kcos, ref_ksin = _reference_forward(x_q, params)

    assert kcos.shape == (N, R, H, W) and ksin.shape == (N, R, H, W)
    np.testing.assert_allclose(np.asarray(kcos, dtype=np.float32),
                               np.asarray(ref_kcos),
                               atol=3e-2, rtol=3e-2)
    np.testing.assert_allclose(np.asarray(ksin, dtype=np.float32),
                               np.asarray(ref_ksin),
                               atol=3e-2, rtol=3e-2)

    print("KERNEL_OK")
</pallas_src>

<mosaic_0001>
module attributes {stable_mosaic.version = 11 : i64} {
  func.func @_head_kernel(%arg0: i32, %arg1: i32, %arg2: memref<1x4x2x128xbf16, #tpu.memory_space<vmem>>, %arg3: memref<4x4xf32, #tpu.memory_space<smem>>, %arg4: memref<4xf32, #tpu.memory_space<smem>>, %arg5: memref<4x4xf32, #tpu.memory_space<smem>>, %arg6: memref<4xf32, #tpu.memory_space<smem>>, %arg7: memref<4x3xf32, #tpu.memory_space<smem>>, %arg8: memref<4x6xf32, #tpu.memory_space<smem>>, %arg9: memref<1x6x2x128xbf16, #tpu.memory_space<vmem>>) attributes {dimension_semantics = [#tpu.dimension_semantics<parallel>, #tpu.dimension_semantics<parallel>], iteration_bounds = array<i64: 2, 1>, scalar_prefetch = 0 : i64, scratch_operands = 0 : i64, tpu.core_type = #tpu.core_type<tc>, window_params = [{transform_indices = @transform_0, window_bounds = array<i64: 1, 4, 2, 128>}, {transform_indices = @transform_1, window_bounds = array<i64: 4, 4>}, {transform_indices = @transform_2, window_bounds = array<i64: 4>}, {transform_indices = @transform_3, window_bounds = array<i64: 4, 4>}, {transform_indices = @transform_4, window_bounds = array<i64: 4>}, {transform_indices = @transform_5, window_bounds = array<i64: 4, 3>}, {transform_indices = @transform_6, window_bounds = array<i64: 4, 6>}, {transform_indices = @transform_7, window_bounds = array<i64: 1, 6, 2, 128>}]} {
    %c0 = arith.constant 0 : index
    %c0_0 = arith.constant 0 : index
    %c0_1 = arith.constant 0 : index
    %c0_2 = arith.constant 0 : index
    %0 = vector.load %arg2[%c0, %c0_0, %c0_1, %c0_2] : memref<1x4x2x128xbf16, #tpu.memory_space<vmem>>, vector<1x1x2x128xbf16>
    %1 = vector.shape_cast %0 : vector<1x1x2x128xbf16> to vector<2x128xbf16>
    %2 = arith.extf %1 : vector<2x128xbf16> to vector<2x128xf32>
    %c0_3 = arith.constant 0 : index
    %c1 = arith.constant 1 : index
    %c0_4 = arith.constant 0 : index
    %c0_5 = arith.constant 0 : index
    %3 = vector.load %arg2[%c0_3, %c1, %c0_4, %c0_5] : memref<1x4x2x128xbf16, #tpu.memory_space<vmem>>, vector<1x1x2x128xbf16>
    %4 = vector.shape_cast %3 : vector<1x1x2x128xbf16> to vector<2x128xbf16>
    %5 = arith.extf %4 : vector<2x128xbf16> to vector<2x128xf32>
    %c0_6 = arith.constant 0 : index
    %c2 = arith.constant 2 : index
    %c0_7 = arith.constant 0 : index
    %c0_8 = arith.constant 0 : index
    %6 = vector.load %arg2[%c0_6, %c2, %c0_7, %c0_8] : memref<1x4x2x128xbf16, #tpu.memory_space<vmem>>, vector<1x1x2x128xbf16>
    %7 = vector.shape_cast %6 : vector<1x1x2x128xbf16> to vector<2x128xbf16>
    %8 = arith.extf %7 : vector<2x128xbf16> to vector<2x128xf32>
    %c0_9 = arith.constant 0 : index
    %c3 = arith.constant 3 : index
    %c0_10 = arith.constant 0 : index
    %c0_11 = arith.constant 0 : index
    %9 = vector.load %arg2[%c0_9, %c3, %c0_10, %c0_11] : memref<1x4x2x128xbf16, #tpu.memory_space<vmem>>, vector<1x1x2x128xbf16>
    %10 = vector.shape_cast %9 : vector<1x1x2x128xbf16> to vector<2x128xbf16>
    %11 = arith.extf %10 : vector<2x128xbf16> to vector<2x128xf32>
    %c0_12 = arith.constant 0 : index
    %c0_13 = arith.constant 0 : index
    %12 = memref.load %arg3[%c0_12, %c0_13] : memref<4x4xf32, #tpu.memory_space<smem>>
    %13 = vector.broadcast %12 : f32 to vector<2x128xf32>
    %14 = arith.mulf %2, %13 : vector<2x128xf32>
    %c1_14 = arith.constant 1 : index
    %c0_15 = arith.constant 0 : index
    %15 = memref.load %arg3[%c1_14, %c0_15] : memref<4x4xf32, #tpu.memory_space<smem>>
    %16 = vector.broadcast %15 : f32 to vector<2x128xf32>
    %17 = arith.mulf %5, %16 : vector<2x128xf32>
    %18 = arith.addf %14, %17 : vector<2x128xf32>
    %c2_16 = arith.constant 2 : index
    %c0_17 = arith.constant 0 : index
    %19 = memref.load %arg3[%c2_16, %c0_17] : memref<4x4xf32, #tpu.memory_space<smem>>
    %20 = vector.broadcast %19 : f32 to vector<2x128xf32>
    %21 = arith.mulf %8, %20 : vector<2x128xf32>
    %22 = arith.addf %18, %21 : vector<2x128xf32>
    %c3_18 = arith.constant 3 : index
    %c0_19 = arith.constant 0 : index
    %23 = memref.load %arg3[%c3_18, %c0_19] : memref<4x4xf32, #tpu.memory_space<smem>>
    %24 = vector.broadcast %23 : f32 to vector<2x128xf32>
    %25 = arith.mulf %11, %24 : vector<2x128xf32>
    %26 = arith.addf %22, %25 : vector<2x128xf32>
    %c0_20 = arith.constant 0 : index
    %27 = memref.load %arg4[%c0_20] : memref<4xf32, #tpu.memory_space<smem>>
    %28 = vector.broadcast %27 : f32 to vector<2x128xf32>
    %29 = arith.addf %26, %28 : vector<2x128xf32>
    %cst = arith.constant 0.000000e+00 : f32
    %30 = vector.broadcast %cst : f32 to vector<2x128xf32>
    %31 = arith.maximumf %29, %30 : vector<2x128xf32>
    %c0_21 = arith.constant 0 : index
    %c1_22 = arith.constant 1 : index
    %32 = memref.load %arg3[%c0_21, %c1_22] : memref<4x4xf32, #tpu.memory_space<smem>>
    %33 = vector.broadcast %32 : f32 to vector<2x128xf32>
    %34 = arith.mulf %2, %33 : vector<2x128xf32>
    %c1_23 = arith.constant 1 : index
    %c1_24 = arith.constant 1 : index
    %35 = memref.load %arg3[%c1_23, %c1_24] : memref<4x4xf32, #tpu.memory_space<smem>>
    %36 = vector.broadcast %35 : f32 to vector<2x128xf32>
    %37 = arith.mulf %5, %36 : vector<2x128xf32>
    %38 = arith.addf %34, %37 : vector<2x128xf32>
    %c2_25 = arith.constant 2 : index
    %c1_26 = arith.constant 1 : index
    %39 = memref.load %arg3[%c2_25, %c1_26] : memref<4x4xf32, #tpu.memory_space<smem>>
    %40 = vector.broadcast %39 : f32 to vector<2x128xf32>
    %41 = arith.mulf %8, %40 : vector<2x128xf32>
    %42 = arith.addf %38, %41 : vector<2x128xf32>
    %c3_27 = arith.constant 3 : index
    %c1_28 = arith.constant 1 : index
    %43 = memref.load %arg3[%c3_27, %c1_28] : memref<4x4xf32, #tpu.memory_space<smem>>
    %44 = vector.broadcast %43 : f32 to vector<2x128xf32>
    %45 = arith.mulf %11, %44 : vector<2x128xf32>
    %46 = arith.addf %42, %45 : vector<2x128xf32>
    %c1_29 = arith.constant 1 : index
    %47 = memref.load %arg4[%c1_29] : memref<4xf32, #tpu.memory_space<smem>>
    %48 = vector.broadcast %47 : f32 to vector<2x128xf32>
    %49 = arith.addf %46, %48 : vector<2x128xf32>
    %cst_30 = arith.constant 0.000000e+00 : f32
    %50 = vector.broadcast %cst_30 : f32 to vector<2x128xf32>
    %51 = arith.maximumf %49, %50 : vector<2x128xf32>
    %c0_31 = arith.constant 0 : index
    %c2_32 = arith.constant 2 : index
    %52 = memref.load %arg3[%c0_31, %c2_32] : memref<4x4xf32, #tpu.memory_space<smem>>
    %53 = vector.broadcast %52 : f32 to vector<2x128xf32>
    %54 = arith.mulf %2, %53 : vector<2x128xf32>
    %c1_33 = arith.constant 1 : index
    %c2_34 = arith.constant 2 : index
    %55 = memref.load %arg3[%c1_33, %c2_34] : memref<4x4xf32, #tpu.memory_space<smem>>
    %56 = vector.broadcast %55 : f32 to vector<2x128xf32>
    %57 = arith.mulf %5, %56 : vector<2x128xf32>
    %58 = arith.addf %54, %57 : vector<2x128xf32>
    %c2_35 = arith.constant 2 : index
    %c2_36 = arith.constant 2 : index
    %59 = memref.load %arg3[%c2_35, %c2_36] : memref<4x4xf32, #tpu.memory_space<smem>>
    %60 = vector.broadcast %59 : f32 to vector<2x128xf32>
    %61 = arith.mulf %8, %60 : vector<2x128xf32>
    %62 = arith.addf %58, %61 : vector<2x128xf32>
    %c3_37 = arith.constant 3 : index
    %c2_38 = arith.constant 2 : index
    %63 = memref.load %arg3[%c3_37, %c2_38] : memref<4x4xf32, #tpu.memory_space<smem>>
    %64 = vector.broadcast %63 : f32 to vector<2x128xf32>
    %65 = arith.mulf %11, %64 : vector<2x128xf32>
    %66 = arith.addf %62, %65 : vector<2x128xf32>
    %c2_39 = arith.constant 2 : index
    %67 = memref.load %arg4[%c2_39] : memref<4xf32, #tpu.memory_space<smem>>
    %68 = vector.broadcast %67 : f32 to vector<2x128xf32>
    %69 = arith.addf %66, %68 : vector<2x128xf32>
    %cst_40 = arith.constant 0.000000e+00 : f32
    %70 = vector.broadcast %cst_40 : f32 to vector<2x128xf32>
    %71 = arith.maximumf %69, %70 : vector<2x128xf32>
    %c0_41 = arith.constant 0 : index
    %c3_42 = arith.constant 3 : index
    %72 = memref.load %arg3[%c0_41, %c3_42] : memref<4x4xf32, #tpu.memory_space<smem>>
    %73 = vector.broadcast %72 : f32 to vector<2x128xf32>
    %74 = arith.mulf %2, %73 : vector<2x128xf32>
    %c1_43 = arith.constant 1 : index
    %c3_44 = arith.constant 3 : index
    %75 = memref.load %arg3[%c1_43, %c3_44] : memref<4x4xf32, #tpu.memory_space<smem>>
    %76 = vector.broadcast %75 : f32 to vector<2x128xf32>
    %77 = arith.mulf %5, %76 : vector<2x128xf32>
    %78 = arith.addf %74, %77 : vector<2x128xf32>
    %c2_45 = arith.constant 2 : index
    %c3_46 = arith.constant 3 : index
    %79 = memref.load %arg3[%c2_45, %c3_46] : memref<4x4xf32, #tpu.memory_space<smem>>
    %80 = vector.broadcast %79 : f32 to vector<2x128xf32>
    %81 = arith.mulf %8, %80 : vector<2x128xf32>
    %82 = arith.addf %78, %81 : vector<2x128xf32>
    %c3_47 = arith.constant 3 : index
    %c3_48 = arith.constant 3 : index
    %83 = memref.load %arg3[%c3_47, %c3_48] : memref<4x4xf32, #tpu.memory_space<smem>>
    %84 = vector.broadcast %83 : f32 to vector<2x128xf32>
    %85 = arith.mulf %11, %84 : vector<2x128xf32>
    %86 = arith.addf %82, %85 : vector<2x128xf32>
    %c3_49 = arith.constant 3 : index
    %87 = memref.load %arg4[%c3_49] : memref<4xf32, #tpu.memory_space<smem>>
    %88 = vector.broadcast %87 : f32 to vector<2x128xf32>
    %89 = arith.addf %86, %88 : vector<2x128xf32>
    %cst_50 = arith.constant 0.000000e+00 : f32
    %90 = vector.broadcast %cst_50 : f32 to vector<2x128xf32>
    %91 = arith.maximumf %89, %90 : vector<2x128xf32>
    %92 = arith.addf %31, %51 : vector<2x128xf32>
    %93 = arith.addf %92, %71 : vector<2x128xf32>
    %94 = arith.addf %93, %91 : vector<2x128xf32>
    %cst_51 = arith.constant 1.1920929E-7 : f32
    %95 = vector.broadcast %cst_51 : f32 to vector<2x128xf32>
    %96 = arith.addf %94, %95 : vector<2x128xf32>
    %97 = tpu.reciprocal %96 {approx = true} : vector<2x128xf32> -> vector<2x128xf32>
    %98 = arith.mulf %31, %97 : vector<2x128xf32>
    %99 = arith.mulf %51, %97 : vector<2x128xf32>
    %100 = arith.mulf %71, %97 : vector<2x128xf32>
    %101 = arith.mulf %91, %97 : vector<2x128xf32>
    %c0_52 = arith.constant 0 : index
    %c0_53 = arith.constant 0 : index
    %102 = memref.load %arg5[%c0_52, %c0_53] : memref<4x4xf32, #tpu.memory_space<smem>>
    %103 = vector.broadcast %102 : f32 to vector<2x128xf32>
    %104 = arith.mulf %2, %103 : vector<2x128xf32>
    %c1_54 = arith.constant 1 : index
    %c0_55 = arith.constant 0 : index
    %105 = memref.load %arg5[%c1_54, %c0_55] : memref<4x4xf32, #tpu.memory_space<smem>>
    %106 = vector.broadcast %105 : f32 to vector<2x128xf32>
    %107 = arith.mulf %5, %106 : vector<2x128xf32>
    %108 = arith.addf %104, %107 : vector<2x128xf32>
    %c2_56 = arith.constant 2 : index
    %c0_57 = arith.constant 0 : index
    %109 = memref.load %arg5[%c2_56, %c0_57] : memref<4x4xf32, #tpu.memory_space<smem>>
    %110 = vector.broadcast %109 : f32 to vector<2x128xf32>
    %111 = arith.mulf %8, %110 : vector<2x128xf32>
    %112 = arith.addf %108, %111 : vector<2x128xf32>
    %c3_58 = arith.constant 3 : index
    %c0_59 = arith.constant 0 : index
    %113 = memref.load %arg5[%c3_58, %c0_59] : memref<4x4xf32, #tpu.memory_space<smem>>
    %114 = vector.broadcast %113 : f32 to vector<2x128xf32>
    %115 = arith.mulf %11, %114 : vector<2x128xf32>
    %116 = arith.addf %112, %115 : vector<2x128xf32>
    %c0_60 = arith.constant 0 : index
    %117 = memref.load %arg6[%c0_60] : memref<4xf32, #tpu.memory_space<smem>>
    %118 = vector.broadcast %117 : f32 to vector<2x128xf32>
    %119 = arith.addf %116, %118 : vector<2x128xf32>
    %cst_61 = arith.constant 0.000000e+00 : f32
    %120 = vector.broadcast %cst_61 : f32 to vector<2x128xf32>
    %121 = arith.maximumf %119, %120 : vector<2x128xf32>
    %c0_62 = arith.constant 0 : index
    %c1_63 = arith.constant 1 : index
    %122 = memref.load %arg5[%c0_62, %c1_63] : memref<4x4xf32, #tpu.memory_space<smem>>
    %123 = vector.broadcast %122 : f32 to vector<2x128xf32>
    %124 = arith.mulf %2, %123 : vector<2x128xf32>
    %c1_64 = arith.constant 1 : index
    %c1_65 = arith.constant 1 : index
    %125 = memref.load %arg5[%c1_64, %c1_65] : memref<4x4xf32, #tpu.memory_space<smem>>
    %126 = vector.broadcast %125 : f32 to vector<2x128xf32>
    %127 = arith.mulf %5, %126 : vector<2x128xf32>
    %128 = arith.addf %124, %127 : vector<2x128xf32>
    %c2_66 = arith.constant 2 : index
    %c1_67 = arith.constant 1 : index
    %129 = memref.load %arg5[%c2_66, %c1_67] : memref<4x4xf32, #tpu.memory_space<smem>>
    %130 = vector.broadcast %129 : f32 to vector<2x128xf32>
    %131 = arith.mulf %8, %130 : vector<2x128xf32>
    %132 = arith.addf %128, %131 : vector<2x128xf32>
    %c3_68 = arith.constant 3 : index
    %c1_69 = arith.constant 1 : index
    %133 = memref.load %arg5[%c3_68, %c1_69] : memref<4x4xf32, #tpu.memory_space<smem>>
    %134 = vector.broadcast %133 : f32 to vector<2x128xf32>
    %135 = arith.mulf %11, %134 : vector<2x128xf32>
    %136 = arith.addf %132, %135 : vector<2x128xf32>
    %c1_70 = arith.constant 1 : index
    %137 = memref.load %arg6[%c1_70] : memref<4xf32, #tpu.memory_space<smem>>
    %138 = vector.broadcast %137 : f32 to vector<2x128xf32>
    %139 = arith.addf %136, %138 : vector<2x128xf32>
    %cst_71 = arith.constant 0.000000e+00 : f32
    %140 = vector.broadcast %cst_71 : f32 to vector<2x128xf32>
    %141 = arith.maximumf %139, %140 : vector<2x128xf32>
    %c0_72 = arith.constant 0 : index
    %c2_73 = arith.constant 2 : index
    %142 = memref.load %arg5[%c0_72, %c2_73] : memref<4x4xf32, #tpu.memory_space<smem>>
    %143 = vector.broadcast %142 : f32 to vector<2x128xf32>
    %144 = arith.mulf %2, %143 : vector<2x128xf32>
    %c1_74 = arith.constant 1 : index
    %c2_75 = arith.constant 2 : index
    %145 = memref.load %arg5[%c1_74, %c2_75] : memref<4x4xf32, #tpu.memory_space<smem>>
    %146 = vector.broadcast %145 : f32 to vector<2x128xf32>
    %147 = arith.mulf %5, %146 : vector<2x128xf32>
    %148 = arith.addf %144, %147 : vector<2x128xf32>
    %c2_76 = arith.constant 2 : index
    %c2_77 = arith.constant 2 : index
    %149 = memref.load %arg5[%c2_76, %c2_77] : memref<4x4xf32, #tpu.memory_space<smem>>
    %150 = vector.broadcast %149 : f32 to vector<2x128xf32>
    %151 = arith.mulf %8, %150 : vector<2x128xf32>
    %152 = arith.addf %148, %151 : vector<2x128xf32>
    %c3_78 = arith.constant 3 : index
    %c2_79 = arith.constant 2 : index
    %153 = memref.load %arg5[%c3_78, %c2_79] : memref<4x4xf32, #tpu.memory_space<smem>>
    %154 = vector.broadcast %153 : f32 to vector<2x128xf32>
    %155 = arith.mulf %11, %154 : vector<2x128xf32>
    %156 = arith.addf %152, %155 : vector<2x128xf32>
    %c2_80 = arith.constant 2 : index
    %157 = memref.load %arg6[%c2_80] : memref<4xf32, #tpu.memory_space<smem>>
    %158 = vector.broadcast %157 : f32 to vector<2x128xf32>
    %159 = arith.addf %156, %158 : vector<2x128xf32>
    %cst_81 = arith.constant 0.000000e+00 : f32
    %160 = vector.broadcast %cst_81 : f32 to vector<2x128xf32>
    %161 = arith.maximumf %159, %160 : vector<2x128xf32>
    %c0_82 = arith.constant 0 : index
    %c3_83 = arith.constant 3 : index
    %162 = memref.load %arg5[%c0_82, %c3_83] : memref<4x4xf32, #tpu.memory_space<smem>>
    %163 = vector.broadcast %162 : f32 to vector<2x128xf32>
    %164 = arith.mulf %2, %163 : vector<2x128xf32>
    %c1_84 = arith.constant 1 : index
    %c3_85 = arith.constant 3 : index
    %165 = memref.load %arg5[%c1_84, %c3_85] : memref<4x4xf32, #tpu.memory_space<smem>>
    %166 = vector.broadcast %165 : f32 to vector<2x128xf32>
    %167 = arith.mulf %5, %166 : vector<2x128xf32>
    %168 = arith.addf %164, %167 : vector<2x128xf32>
    %c2_86 = arith.constant 2 : index
    %c3_87 = arith.constant 3 : index
    %169 = memref.load %arg5[%c2_86, %c3_87] : memref<4x4xf32, #tpu.memory_space<smem>>
    %170 = vector.broadcast %169 : f32 to vector<2x128xf32>
    %171 = arith.mulf %8, %170 : vector<2x128xf32>
    %172 = arith.addf %168, %171 : vector<2x128xf32>
    %c3_88 = arith.constant 3 : index
    %c3_89 = arith.constant 3 : index
    %173 = memref.load %arg5[%c3_88, %c3_89] : memref<4x4xf32, #tpu.memory_space<smem>>
    %174 = vector.broadcast %173 : f32 to vector<2x128xf32>
    %175 = arith.mulf %11, %174 : vector<2x128xf32>
    %176 = arith.addf %172, %175 : vector<2x128xf32>
    %c3_90 = arith.constant 3 : index
    %177 = memref.load %arg6[%c3_90] : memref<4xf32, #tpu.memory_space<smem>>
    %178 = vector.broadcast %177 : f32 to vector<2x128xf32>
    %179 = arith.addf %176, %178 : vector<2x128xf32>
    %cst_91 = arith.constant 0.000000e+00 : f32
    %180 = vector.broadcast %cst_91 : f32 to vector<2x128xf32>
    %181 = arith.maximumf %179, %180 : vector<2x128xf32>
    %182 = arith.addf %121, %141 : vector<2x128xf32>
    %183 = arith.addf %182, %161 : vector<2x128xf32>
    %184 = arith.addf %183, %181 : vector<2x128xf32>
    %cst_92 = arith.constant 1.1920929E-7 : f32
    %185 = vector.broadcast %cst_92 : f32 to vector<2x128xf32>
    %186 = arith.addf %184, %185 : vector<2x128xf32>
    %187 = tpu.reciprocal %186 {approx = true} : vector<2x128xf32> -> vector<2x128xf32>
    %188 = arith.mulf %121, %187 : vector<2x128xf32>
    %189 = arith.mulf %141, %187 : vector<2x128xf32>
    %190 = arith.mulf %161, %187 : vector<2x128xf32>
    %191 = arith.mulf %181, %187 : vector<2x128xf32>
    %c0_93 = arith.constant 0 : index
    %c0_94 = arith.constant 0 : index
    %192 = memref.load %arg7[%c0_93, %c0_94] : memref<4x3xf32, #tpu.memory_space<smem>>
    %193 = vector.broadcast %192 : f32 to vector<2x128xf32>
    %194 = arith.mulf %98, %193 : vector<2x128xf32>
    %c1_95 = arith.constant 1 : index
    %c0_96 = arith.constant 0 : index
    %195 = memref.load %arg7[%c1_95, %c0_96] : memref<4x3xf32, #tpu.memory_space<smem>>
    %196 = vector.broadcast %195 : f32 to vector<2x128xf32>
    %197 = arith.mulf %99, %196 : vector<2x128xf32>
    %198 = arith.addf %194, %197 : vector<2x128xf32>
    %c2_97 = arith.constant 2 : index
    %c0_98 = arith.constant 0 : index
    %199 = memref.load %arg7[%c2_97, %c0_98] : memref<4x3xf32, #tpu.memory_space<smem>>
    %200 = vector.broadcast %199 : f32 to vector<2x128xf32>
    %201 = arith.mulf %100, %200 : vector<2x128xf32>
    %202 = arith.addf %198, %201 : vector<2x128xf32>
    %c3_99 = arith.constant 3 : index
    %c0_100 = arith.constant 0 : index
    %203 = memref.load %arg7[%c3_99, %c0_100] : memref<4x3xf32, #tpu.memory_space<smem>>
    %204 = vector.broadcast %203 : f32 to vector<2x128xf32>
    %205 = arith.mulf %101, %204 : vector<2x128xf32>
    %206 = arith.addf %202, %205 : vector<2x128xf32>
    %c0_101 = arith.constant 0 : index
    %c1_102 = arith.constant 1 : index
    %207 = memref.load %arg7[%c0_101, %c1_102] : memref<4x3xf32, #tpu.memory_space<smem>>
    %208 = vector.broadcast %207 : f32 to vector<2x128xf32>
    %209 = arith.mulf %98, %208 : vector<2x128xf32>
    %c1_103 = arith.constant 1 : index
    %c1_104 = arith.constant 1 : index
    %210 = memref.load %arg7[%c1_103, %c1_104] : memref<4x3xf32, #tpu.memory_space<smem>>
    %211 = vector.broadcast %210 : f32 to vector<2x128xf32>
    %212 = arith.mulf %99, %211 : vector<2x128xf32>
    %213 = arith.addf %209, %212 : vector<2x128xf32>
    %c2_105 = arith.constant 2 : index
    %c1_106 = arith.constant 1 : index
    %214 = memref.load %arg7[%c2_105, %c1_106] : memref<4x3xf32, #tpu.memory_space<smem>>
    %215 = vector.broadcast %214 : f32 to vector<2x128xf32>
    %216 = arith.mulf %100, %215 : vector<2x128xf32>
    %217 = arith.addf %213, %216 : vector<2x128xf32>
    %c3_107 = arith.constant 3 : index
    %c1_108 = arith.constant 1 : index
    %218 = memref.load %arg7[%c3_107, %c1_108] : memref<4x3xf32, #tpu.memory_space<smem>>
    %219 = vector.broadcast %218 : f32 to vector<2x128xf32>
    %220 = arith.mulf %101, %219 : vector<2x128xf32>
    %221 = arith.addf %217, %220 : vector<2x128xf32>
    %c0_109 = arith.constant 0 : index
    %c2_110 = arith.constant 2 : index
    %222 = memref.load %arg7[%c0_109, %c2_110] : memref<4x3xf32, #tpu.memory_space<smem>>
    %223 = vector.broadcast %222 : f32 to vector<2x128xf32>
    %224 = arith.mulf %98, %223 : vector<2x128xf32>
    %c1_111 = arith.constant 1 : index
    %c2_112 = arith.constant 2 : index
    %225 = memref.load %arg7[%c1_111, %c2_112] : memref<4x3xf32, #tpu.memory_space<smem>>
    %226 = vector.broadcast %225 : f32 to vector<2x128xf32>
    %227 = arith.mulf %99, %226 : vector<2x128xf32>
    %228 = arith.addf %224, %227 : vector<2x128xf32>
    %c2_113 = arith.constant 2 : index
    %c2_114 = arith.constant 2 : index
    %229 = memref.load %arg7[%c2_113, %c2_114] : memref<4x3xf32, #tpu.memory_space<smem>>
    %230 = vector.broadcast %229 : f32 to vector<2x128xf32>
    %231 = arith.mulf %100, %230 : vector<2x128xf32>
    %232 = arith.addf %228, %231 : vector<2x128xf32>
    %c3_115 = arith.constant 3 : index
    %c2_116 = arith.constant 2 : index
    %233 = memref.load %arg7[%c3_115, %c2_116] : memref<4x3xf32, #tpu.memory_space<smem>>
    %234 = vector.broadcast %233 : f32 to vector<2x128xf32>
    %235 = arith.mulf %101, %234 : vector<2x128xf32>
    %236 = arith.addf %232, %235 : vector<2x128xf32>
    %c0_117 = arith.constant 0 : index
    %c0_118 = arith.constant 0 : index
    %237 = memref.load %arg8[%c0_117, %c0_118] : memref<4x6xf32, #tpu.memory_space<smem>>
    %238 = vector.broadcast %237 : f32 to vector<2x128xf32>
    %239 = arith.mulf %188, %238 : vector<2x128xf32>
    %c1_119 = arith.constant 1 : index
    %c0_120 = arith.constant 0 : index
    %240 = memref.load %arg8[%c1_119, %c0_120] : memref<4x6xf32, #tpu.memory_space<smem>>
    %241 = vector.broadcast %240 : f32 to vector<2x128xf32>
    %242 = arith.mulf %189, %241 : vector<2x128xf32>
    %243 = arith.addf %239, %242 : vector<2x128xf32>
    %c2_121 = arith.constant 2 : index
    %c0_122 = arith.constant 0 : index
    %244 = memref.load %arg8[%c2_121, %c0_122] : memref<4x6xf32, #tpu.memory_space<smem>>
    %245 = vector.broadcast %244 : f32 to vector<2x128xf32>
    %246 = arith.mulf %190, %245 : vector<2x128xf32>
    %247 = arith.addf %243, %246 : vector<2x128xf32>
    %c3_123 = arith.constant 3 : index
    %c0_124 = arith.constant 0 : index
    %248 = memref.load %arg8[%c3_123, %c0_124] : memref<4x6xf32, #tpu.memory_space<smem>>
    %249 = vector.broadcast %248 : f32 to vector<2x128xf32>
    %250 = arith.mulf %191, %249 : vector<2x128xf32>
    %251 = arith.addf %247, %250 : vector<2x128xf32>
    %c0_125 = arith.constant 0 : index
    %c1_126 = arith.constant 1 : index
    %252 = memref.load %arg8[%c0_125, %c1_126] : memref<4x6xf32, #tpu.memory_space<smem>>
    %253 = vector.broadcast %252 : f32 to vector<2x128xf32>
    %254 = arith.mulf %188, %253 : vector<2x128xf32>
    %c1_127 = arith.constant 1 : index
    %c1_128 = arith.constant 1 : index
    %255 = memref.load %arg8[%c1_127, %c1_128] : memref<4x6xf32, #tpu.memory_space<smem>>
    %256 = vector.broadcast %255 : f32 to vector<2x128xf32>
    %257 = arith.mulf %189, %256 : vector<2x128xf32>
    %258 = arith.addf %254, %257 : vector<2x128xf32>
    %c2_129 = arith.constant 2 : index
    %c1_130 = arith.constant 1 : index
    %259 = memref.load %arg8[%c2_129, %c1_130] : memref<4x6xf32, #tpu.memory_space<smem>>
    %260 = vector.broadcast %259 : f32 to vector<2x128xf32>
    %261 = arith.mulf %190, %260 : vector<2x128xf32>
    %262 = arith.addf %258, %261 : vector<2x128xf32>
    %c3_131 = arith.constant 3 : index
    %c1_132 = arith.constant 1 : index
    %263 = memref.load %arg8[%c3_131, %c1_132] : memref<4x6xf32, #tpu.memory_space<smem>>
    %264 = vector.broadcast %263 : f32 to vector<2x128xf32>
    %265 = arith.mulf %191, %264 : vector<2x128xf32>
    %266 = arith.addf %262, %265 : vector<2x128xf32>
    %c0_133 = arith.constant 0 : index
    %c2_134 = arith.constant 2 : index
    %267 = memref.load %arg8[%c0_133, %c2_134] : memref<4x6xf32, #tpu.memory_space<smem>>
    %268 = vector.broadcast %267 : f32 to vector<2x128xf32>
    %269 = arith.mulf %188, %268 : vector<2x128xf32>
    %c1_135 = arith.constant 1 : index
    %c2_136 = arith.constant 2 : index
    %270 = memref.load %arg8[%c1_135, %c2_136] : memref<4x6xf32, #tpu.memory_space<smem>>
    %271 = vector.broadcast %270 : f32 to vector<2x128xf32>
    %272 = arith.mulf %189, %271 : vector<2x128xf32>
    %273 = arith.addf %269, %272 : vector<2x128xf32>
    %c2_137 = arith.constant 2 : index
    %c2_138 = arith.constant 2 : index
    %274 = memref.load %arg8[%c2_137, %c2_138] : memref<4x6xf32, #tpu.memory_space<smem>>
    %275 = vector.broadcast %274 : f32 to vector<2x128xf32>
    %276 = arith.mulf %190, %275 : vector<2x128xf32>
    %277 = arith.addf %273, %276 : vector<2x128xf32>
    %c3_139 = arith.constant 3 : index
    %c2_140 = arith.constant 2 : index
    %278 = memref.load %arg8[%c3_139, %c2_140] : memref<4x6xf32, #tpu.memory_space<smem>>
    %279 = vector.broadcast %278 : f32 to vector<2x128xf32>
    %280 = arith.mulf %191, %279 : vector<2x128xf32>
    %281 = arith.addf %277, %280 : vector<2x128xf32>
    %c0_141 = arith.constant 0 : index
    %c3_142 = arith.constant 3 : index
    %282 = memref.load %arg8[%c0_141, %c3_142] : memref<4x6xf32, #tpu.memory_space<smem>>
    %283 = vector.broadcast %282 : f32 to vector<2x128xf32>
    %284 = arith.mulf %188, %283 : vector<2x128xf32>
    %c1_143 = arith.constant 1 : index
    %c3_144 = arith.constant 3 : index
    %285 = memref.load %arg8[%c1_143, %c3_144] : memref<4x6xf32, #tpu.memory_space<smem>>
    %286 = vector.broadcast %285 : f32 to vector<2x128xf32>
    %287 = arith.mulf %189, %286 : vector<2x128xf32>
    %288 = arith.addf %284, %287 : vector<2x128xf32>
    %c2_145 = arith.constant 2 : index
    %c3_146 = arith.constant 3 : index
    %289 = memref.load %arg8[%c2_145, %c3_146] : memref<4x6xf32, #tpu.memory_space<smem>>
    %290 = vector.broadcast %289 : f32 to vector<2x128xf32>
    %291 = arith.mulf %190, %290 : vector<2x128xf32>
    %292 = arith.addf %288, %291 : vector<2x128xf32>
    %c3_147 = arith.constant 3 : index
    %c3_148 = arith.constant 3 : index
    %293 = memref.load %arg8[%c3_147, %c3_148] : memref<4x6xf32, #tpu.memory_space<smem>>
    %294 = vector.broadcast %293 : f32 to vector<2x128xf32>
    %295 = arith.mulf %191, %294 : vector<2x128xf32>
    %296 = arith.addf %292, %295 : vector<2x128xf32>
    %c0_149 = arith.constant 0 : index
    %c4 = arith.constant 4 : index
    %297 = memref.load %arg8[%c0_149, %c4] : memref<4x6xf32, #tpu.memory_space<smem>>
    %298 = vector.broadcast %297 : f32 to vector<2x128xf32>
    %299 = arith.mulf %188, %298 : vector<2x128xf32>
    %c1_150 = arith.constant 1 : index
    %c4_151 = arith.constant 4 : index
    %300 = memref.load %arg8[%c1_150, %c4_151] : memref<4x6xf32, #tpu.memory_space<smem>>
    %301 = vector.broadcast %300 : f32 to vector<2x128xf32>
    %302 = arith.mulf %189, %301 : vector<2x128xf32>
    %303 = arith.addf %299, %302 : vector<2x128xf32>
    %c2_152 = arith.constant 2 : index
    %c4_153 = arith.constant 4 : index
    %304 = memref.load %arg8[%c2_152, %c4_153] : memref<4x6xf32, #tpu.memory_space<smem>>
    %305 = vector.broadcast %304 : f32 to vector<2x128xf32>
    %306 = arith.mulf %190, %305 : vector<2x128xf32>
    %307 = arith.addf %303, %306 : vector<2x128xf32>
    %c3_154 = arith.constant 3 : index
    %c4_155 = arith.constant 4 : index
    %308 = memref.load %arg8[%c3_154, %c4_155] : memref<4x6xf32, #tpu.memory_space<smem>>
    %309 = vector.broadcast %308 : f32 to vector<2x128xf32>
    %310 = arith.mulf %191, %309 : vector<2x128xf32>
    %311 = arith.addf %307, %310 : vector<2x128xf32>
    %c0_156 = arith.constant 0 : index
    %c5 = arith.constant 5 : index
    %312 = memref.load %arg8[%c0_156, %c5] : memref<4x6xf32, #tpu.memory_space<smem>>
    %313 = vector.broadcast %312 : f32 to vector<2x128xf32>
    %314 = arith.mulf %188, %313 : vector<2x128xf32>
    %c1_157 = arith.constant 1 : index
    %c5_158 = arith.constant 5 : index
    %315 = memref.load %arg8[%c1_157, %c5_158] : memref<4x6xf32, #tpu.memory_space<smem>>
    %316 = vector.broadcast %315 : f32 to vector<2x128xf32>
    %317 = arith.mulf %189, %316 : vector<2x128xf32>
    %318 = arith.addf %314, %317 : vector<2x128xf32>
    %c2_159 = arith.constant 2 : index
    %c5_160 = arith.constant 5 : index
    %319 = memref.load %arg8[%c2_159, %c5_160] : memref<4x6xf32, #tpu.memory_space<smem>>
    %320 = vector.broadcast %319 : f32 to vector<2x128xf32>
    %321 = arith.mulf %190, %320 : vector<2x128xf32>
    %322 = arith.addf %318, %321 : vector<2x128xf32>
    %c3_161 = arith.constant 3 : index
    %c5_162 = arith.constant 5 : index
    %323 = memref.load %arg8[%c3_161, %c5_162] : memref<4x6xf32, #tpu.memory_space<smem>>
    %324 = vector.broadcast %323 : f32 to vector<2x128xf32>
    %325 = arith.mulf %191, %324 : vector<2x128xf32>
    %326 = arith.addf %322, %325 : vector<2x128xf32>
    %327 = math.absf %206 : vector<2x128xf32>
    %cst_163 = arith.constant 1.000000e+00 : f32
    %328 = vector.broadcast %cst_163 : f32 to vector<2x128xf32>
    %329 = arith.addf %328, %327 : vector<2x128xf32>
    %330 = tpu.reciprocal %329 {approx = true} : vector<2x128xf32> -> vector<2x128xf32>
    %331 = arith.mulf %206, %330 : vector<2x128xf32>
    %cst_164 = arith.constant 1.000000e+00 : f32
    %332 = vector.broadcast %cst_164 : f32 to vector<2x128xf32>
    %333 = arith.addf %332, %331 : vector<2x128xf32>
    %334 = arith.mulf %251, %251 : vector<2x128xf32>
    %335 = arith.mulf %296, %296 : vector<2x128xf32>
    %336 = arith.addf %334, %335 : vector<2x128xf32>
    %cst_165 = arith.constant 1.42108547E-14 : f32
    %337 = vector.broadcast %cst_165 : f32 to vector<2x128xf32>
    %338 = arith.addf %336, %337 : vector<2x128xf32>
    %339 = math.rsqrt %338 : vector<2x128xf32>
    %cst_166 = arith.constant 1.1920929E-7 : f32
    %340 = vector.broadcast %cst_166 : f32 to vector<2x128xf32>
    %341 = arith.addf %333, %340 : vector<2x128xf32>
    %342 = arith.mulf %341, %339 : vector<2x128xf32>
    %343 = arith.mulf %251, %342 : vector<2x128xf32>
    %344 = arith.truncf %343 : vector<2x128xf32> to vector<2x128xbf16>
    %c0_167 = arith.constant 0 : index
    %c0_168 = arith.constant 0 : index
    %c0_169 = arith.constant 0 : index
    %c0_170 = arith.constant 0 : index
    %345 = vector.load %arg9[%c0_167, %c0_168, %c0_169, %c0_170] : memref<1x6x2x128xbf16, #tpu.memory_space<vmem>>, vector<1x1x2x128xbf16>
    %346 = vector.shape_cast %345 : vector<1x1x2x128xbf16> to vector<2x128xbf16>
    %347 = vector.shape_cast %344 : vector<2x128xbf16> to vector<1x1x2x128xbf16>
    tpu.vector_store %arg9[%c0_167, %c0_168, %c0_169, %c0_170], %347 {strides = array<i32>} : memref<1x6x2x128xbf16, #tpu.memory_space<vmem>>, vector<1x1x2x128xbf16>,
    %348 = arith.mulf %296, %342 : vector<2x128xf32>
    %349 = arith.truncf %348 : vector<2x128xf32> to vector<2x128xbf16>
    %c0_171 = arith.constant 0 : index
    %c3_172 = arith.constant 3 : index
    %c0_173 = arith.constant 0 : index
    %c0_174 = arith.constant 0 : index
    %350 = vector.load %arg9[%c0_171, %c3_172, %c0_173, %c0_174] : memref<1x6x2x128xbf16, #tpu.memory_space<vmem>>, vector<1x1x2x128xbf16>
    %351 = vector.shape_cast %350 : vector<1x1x2x128xbf16> to vector<2x128xbf16>
    %352 = vector.shape_cast %349 : vector<2x128xbf16> to vector<1x1x2x128xbf16>
    tpu.vector_store %arg9[%c0_171, %c3_172, %c0_173, %c0_174], %352 {strides = array<i32>} : memref<1x6x2x128xbf16, #tpu.memory_space<vmem>>, vector<1x1x2x128xbf16>,
    %353 = math.absf %221 : vector<2x128xf32>
    %cst_175 = arith.constant 1.000000e+00 : f32
    %354 = vector.broadcast %cst_175 : f32 to vector<2x128xf32>
    %355 = arith.addf %354, %353 : vector<2x128xf32>
    %356 = tpu.reciprocal %355 {approx = true} : vector<2x128xf32> -> vector<2x128xf32>
    %357 = arith.mulf %221, %356 : vector<2x128xf32>
    %cst_176 = arith.constant 1.000000e+00 : f32
    %358 = vector.broadcast %cst_176 : f32 to vector<2x128xf32>
    %359 = arith.addf %358, %357 : vector<2x128xf32>
    %360 = arith.mulf %266, %266 : vector<2x128xf32>
    %361 = arith.mulf %311, %311 : vector<2x128xf32>
    %362 = arith.addf %360, %361 : vector<2x128xf32>
    %cst_177 = arith.constant 1.42108547E-14 : f32
    %363 = vector.broadcast %cst_177 : f32 to vector<2x128xf32>
    %364 = arith.addf %362, %363 : vector<2x128xf32>
    %365 = math.rsqrt %364 : vector<2x128xf32>
    %cst_178 = arith.constant 1.1920929E-7 : f32
    %366 = vector.broadcast %cst_178 : f32 to vector<2x128xf32>
    %367 = arith.addf %359, %366 : vector<2x128xf32>
    %368 = arith.mulf %367, %365 : vector<2x128xf32>
    %369 = arith.mulf %266, %368 : vector<2x128xf32>
    %370 = arith.truncf %369 : vector<2x128xf32> to vector<2x128xbf16>
    %c0_179 = arith.constant 0 : index
    %c1_180 = arith.constant 1 : index
    %c0_181 = arith.constant 0 : index
    %c0_182 = arith.constant 0 : index
    %371 = vector.load %arg9[%c0_179, %c1_180, %c0_181, %c0_182] : memref<1x6x2x128xbf16, #tpu.memory_space<vmem>>, vector<1x1x2x128xbf16>
    %372 = vector.shape_cast %371 : vector<1x1x2x128xbf16> to vector<2x128xbf16>
    %373 = vector.shape_cast %370 : vector<2x128xbf16> to vector<1x1x2x128xbf16>
    tpu.vector_store %arg9[%c0_179, %c1_180, %c0_181, %c0_182], %373 {strides = array<i32>} : memref<1x6x2x128xbf16, #tpu.memory_space<vmem>>, vector<1x1x2x128xbf16>,
    %374 = arith.mulf %311, %368 : vector<2x128xf32>
    %375 = arith.truncf %374 : vector<2x128xf32> to vector<2x128xbf16>
    %c0_183 = arith.constant 0 : index
    %c4_184 = arith.constant 4 : index
    %c0_185 = arith.constant 0 : index
    %c0_186 = arith.constant 0 : index
    %376 = vector.load %arg9[%c0_183, %c4_184, %c0_185, %c0_186] : memref<1x6x2x128xbf16, #tpu.memory_space<vmem>>, vector<1x1x2x128xbf16>
    %377 = vector.shape_cast %376 : vector<1x1x2x128xbf16> to vector<2x128xbf16>
    %378 = vector.shape_cast %375 : vector<2x128xbf16> to vector<1x1x2x128xbf16>
    tpu.vector_store %arg9[%c0_183, %c4_184, %c0_185, %c0_186], %378 {strides = array<i32>} : memref<1x6x2x128xbf16, #tpu.memory_space<vmem>>, vector<1x1x2x128xbf16>,
    %379 = math.absf %236 : vector<2x128xf32>
    %cst_187 = arith.constant 1.000000e+00 : f32
    %380 = vector.broadcast %cst_187 : f32 to vector<2x128xf32>
    %381 = arith.addf %380, %379 : vector<2x128xf32>
    %382 = tpu.reciprocal %381 {approx = true} : vector<2x128xf32> -> vector<2x128xf32>
    %383 = arith.mulf %236, %382 : vector<2x128xf32>
    %cst_188 = arith.constant 1.000000e+00 : f32
    %384 = vector.broadcast %cst_188 : f32 to vector<2x128xf32>
    %385 = arith.addf %384, %383 : vector<2x128xf32>
    %386 = arith.mulf %281, %281 : vector<2x128xf32>
    %387 = arith.mulf %326, %326 : vector<2x128xf32>
    %388 = arith.addf %386, %387 : vector<2x128xf32>
    %cst_189 = arith.constant 1.42108547E-14 : f32
    %389 = vector.broadcast %cst_189 : f32 to vector<2x128xf32>
    %390 = arith.addf %388, %389 : vector<2x128xf32>
    %391 = math.rsqrt %390 : vector<2x128xf32>
    %cst_190 = arith.constant 1.1920929E-7 : f32
    %392 = vector.broadcast %cst_190 : f32 to vector<2x128xf32>
    %393 = arith.addf %385, %392 : vector<2x128xf32>
    %394 = arith.mulf %393, %391 : vector<2x128xf32>
    %395 = arith.mulf %281, %394 : vector<2x128xf32>
    %396 = arith.truncf %395 : vector<2x128xf32> to vector<2x128xbf16>
    %c0_191 = arith.constant 0 : index
    %c2_192 = arith.constant 2 : index
    %c0_193 = arith.constant 0 : index
    %c0_194 = arith.constant 0 : index
    %397 = vector.load %arg9[%c0_191, %c2_192, %c0_193, %c0_194] : memref<1x6x2x128xbf16, #tpu.memory_space<vmem>>, vector<1x1x2x128xbf16>
    %398 = vector.shape_cast %397 : vector<1x1x2x128xbf16> to vector<2x128xbf16>
    %399 = vector.shape_cast %396 : vector<2x128xbf16> to vector<1x1x2x128xbf16>
    tpu.vector_store %arg9[%c0_191, %c2_192, %c0_193, %c0_194], %399 {strides = array<i32>} : memref<1x6x2x128xbf16, #tpu.memory_space<vmem>>, vector<1x1x2x128xbf16>,
    %400 = arith.mulf %326, %394 : vector<2x128xf32>
    %401 = arith.truncf %400 : vector<2x128xf32> to vector<2x128xbf16>
    %c0_195 = arith.constant 0 : index
    %c5_196 = arith.constant 5 : index
    %c0_197 = arith.constant 0 : index
    %c0_198 = arith.constant 0 : index
    %402 = vector.load %arg9[%c0_195, %c5_196, %c0_197, %c0_198] : memref<1x6x2x128xbf16, #tpu.memory_space<vmem>>, vector<1x1x2x128xbf16>
    %403 = vector.shape_cast %402 : vector<1x1x2x128xbf16> to vector<2x128xbf16>
    %404 = vector.shape_cast %401 : vector<2x128xbf16> to vector<1x1x2x128xbf16>
    tpu.vector_store %arg9[%c0_195, %c5_196, %c0_197, %c0_198], %404 {strides = array<i32>} : memref<1x6x2x128xbf16, #tpu.memory_space<vmem>>, vector<1x1x2x128xbf16>,
    return
  }
  func.func @transform_0(%arg0: i32, %arg1: i32) -> (i32, i32, i32, i32) {
    %c0_i32 = arith.constant 0 : i32
    %c0_i32_0 = arith.constant 0 : i32
    %c0_i32_1 = arith.constant 0 : i32
    return %arg0, %c0_i32, %arg1, %c0_i32_0 : i32, i32, i32, i32
  }
  func.func @transform_1(%arg0: i32, %arg1: i32) -> (i32, i32) {
    %c0_i32 = arith.constant 0 : i32
    %c0_i32_0 = arith.constant 0 : i32
    %c0_i32_1 = arith.constant 0 : i32
    return %c0_i32, %c0_i32_0 : i32, i32
  }
  func.func @transform_2(%arg0: i32, %arg1: i32) -> i32 {
    %c0_i32 = arith.constant 0 : i32
    %c0_i32_0 = arith.constant 0 : i32
    return %c0_i32 : i32
  }
  func.func @transform_3(%arg0: i32, %arg1: i32) -> (i32, i32) {
    %c0_i32 = arith.constant 0 : i32
    %c0_i32_0 = arith.constant 0 : i32
    %c0_i32_1 = arith.constant 0 : i32
    return %c0_i32, %c0_i32_0 : i32, i32
  }
  func.func @transform_4(%arg0: i32, %arg1: i32) -> i32 {
    %c0_i32 = arith.constant 0 : i32
    %c0_i32_0 = arith.constant 0 : i32
    return %c0_i32 : i32
  }
  func.func @transform_5(%arg0: i32, %arg1: i32) -> (i32, i32) {
    %c0_i32 = arith.constant 0 : i32
    %c0_i32_0 = arith.constant 0 : i32
    %c0_i32_1 = arith.constant 0 : i32
    return %c0_i32, %c0_i32_0 : i32, i32
  }
  func.func @transform_6(%arg0: i32, %arg1: i32) -> (i32, i32) {
    %c0_i32 = arith.constant 0 : i32
    %c0_i32_0 = arith.constant 0 : i32
    %c0_i32_1 = arith.constant 0 : i32
    return %c0_i32, %c0_i32_0 : i32, i32
  }
  func.func @transform_7(%arg0: i32, %arg1: i32) -> (i32, i32, i32, i32) {
    %c0_i32 = arith.constant 0 : i32
    %c0_i32_0 = arith.constant 0 : i32
    %c0_i32_1 = arith.constant 0 : i32
    return %arg0, %c0_i32, %arg1, %c0_i32_0 : i32, i32, i32, i32
  }
}

</mosaic_0001>

<llo_original>
// kernel: tpu_custom_call.1
$region0: #{tpu_custom_call.1}
  #allocation0 [shape = 'u32[]', space=smem, size = 0x4, offset = 0x4, fixed_abs, tag = 'smem constant byte address 0x4 - core index']
  #allocation1 [shape = 'u32[144,128]{1,0:T(1,128)}', space=vmem, size = 0x12000, scoped, tag = 'internal scratch']
  %s0 = inlined_call_operand.hbm [shape: bf16[2,4,2,128], index: 0, kind: input, shape index: {}]
  %s1 = inlined_call_operand.hbm [shape: f32[4,4], index: 1, kind: input, shape index: {}]
  %s2 = inlined_call_operand.vmem [shape: f32[4], index: 2, kind: input, shape index: {}]
  %s3 = inlined_call_operand.vmem [shape: f32[4,4], index: 3, kind: input, shape index: {}]
  %s4 = inlined_call_operand.hbm [shape: f32[4], index: 4, kind: input, shape index: {}]
  %s5 = inlined_call_operand.vmem [shape: f32[4,3], index: 5, kind: input, shape index: {}]
  %s6 = inlined_call_operand.hbm [shape: f32[4,6], index: 6, kind: input, shape index: {}]
  %s7 = inlined_call_operand.hbm [shape: bf16[2,6,2,128], index: 7, kind: output, shape index: {}]
  %s8 = sld [smem:[#allocation0]]
  $region89: #{tpu_custom_call.1} parent=0
    _
  %s10 = ssub.s32 1, %s8
  %s11 = scalar_select 0, %s10, %s8
  $region1: #{tpu_custom_call.1} parent=0
    #allocation2 [shape = 'u8[4096]{0}', space=vmem, size = 0x1000, scoped, tag = 'input window, operand 0']
    #allocation3 [shape = 's32[2]{0}', space=sflag, size = 0x8, scoped, tag = 'scoped memory for tpu_custom_call.1']
    #allocation4 [shape = 's32[2]{0}', space=sflag, size = 0x8, scoped, tag = 'scoped memory for tpu_custom_call.1']
    #allocation5 [shape = 's32[2]{0}', space=sflag, size = 0x8, scoped, tag = 'scoped memory for tpu_custom_call.1']
    #allocation6 [shape = 's32[2]{0}', space=sflag, size = 0x8, scoped, tag = 'scoped memory for tpu_custom_call.1']
    #allocation7 [shape = 'u8[2048]{0}', space=smem, size = 0x800, scoped, tag = 'input window, operand 1, single buffered']
    #allocation8 [shape = 'u8[512]{0}', space=smem, size = 0x200, scoped, tag = 'input window, operand 2, single buffered']
    #allocation9 [shape = 'u8[2048]{0}', space=smem, size = 0x800, scoped, tag = 'input window, operand 3, single buffered']
    #allocation10 [shape = 's32[1]{0}', space=sflag, size = 0x4, scoped, tag = 'scoped memory for tpu_custom_call.1']
    #allocation11 [shape = 'u8[512]{0}', space=smem, size = 0x200, scoped, tag = 'input window, operand 4, single buffered']
    #allocation12 [shape = 's32[1]{0}', space=sflag, size = 0x4, scoped, tag = 'scoped memory for tpu_custom_call.1']
    #allocation13 [shape = 'u8[2048]{0}', space=smem, size = 0x800, scoped, tag = 'input window, operand 5, single buffered']
    #allocation14 [shape = 'u8[2048]{0}', space=smem, size = 0x800, scoped, tag = 'input window, operand 6, single buffered']
    #allocation15 [shape = 'u8[6144]{0}', space=vmem, size = 0x1800, scoped, tag = 'output window, operand 0']
    %12 = vsyncpa [#allocation3], 0
    %s13 = scalar_lea.sflag [#allocation3], 1
    %14 = vsyncpa %s13, 0
    %15 = vsyncpa [#allocation5], 0
    %16 = vsyncpa [#allocation6], 0
    %17 = vsyncpa [#allocation10], 0
    %18 = vsyncpa [#allocation12], 0
    %19 = vsyncpa [#allocation4], 0
    %s20 = scalar_lea.sflag [#allocation4], 1
    %21 = vsyncpa %s20, 0
    loop: start=0, step=1, limit=4
    $region2: #{tpu_custom_call.1} parent=1 // loop_pre_header
      _
    $region3: #{tpu_custom_call.1} parent=1 // loop_header
      %s23 = sphi 0, %s27
      %p24 = scmp.ge.s32.totalorder %s23, 4
      %s30 = sphi 0, %s42
      %s31 = sphi 0, %s38
      %s32 = sphi 0, %s30
      %s33 = sphi 0, %s31
      %s34 = sphi 0, %s32
      %s35 = sphi 0, %s33
      %s47 = sphi 0, %s49
      %s50 = sphi 0, %s47
      %s51 = sphi 0, %s50
      %s67 = sphi 0, %s51
      %s71 = sphi 0, %s71
      %s73 = sphi 0, %s71
      %s74 = sphi 0, %s73
      %s88 = sphi 0, %s74
      %s92 = sphi 0, %s92
      %s94 = sphi 0, %s92
      %s95 = sphi 0, %s94
      %s109 = sphi 0, %s95
      %s113 = sphi 0, %s113
      %s115 = sphi 0, %s113
      %s116 = sphi 0, %s115
      %s130 = sphi 0, %s116
      %s134 = sphi 0, %s134
      %s136 = sphi 0, %s134
      %s137 = sphi 0, %s136
      %s151 = sphi 0, %s137
      %s155 = sphi 0, %s155
      %s157 = sphi 0, %s155
      %s158 = sphi 0, %s157
      %s172 = sphi 0, %s158
      %s176 = sphi 0, %s176
      %s178 = sphi 0, %s176
      %s179 = sphi 0, %s178
      %s193 = sphi 0, %s179
      %s201 = sphi 0, %s203
      %s204 = sphi 0, %s201
      %s205 = sphi 0, %s204
      %s221 = sphi 0, %s205
    $region4: #{tpu_custom_call.1} parent=1 // loop_header_branch
      %26 = sbr.rel (%p24) target = $region8
    $region5: #{tpu_custom_call.1} parent=1 // loop_body
      %s28 = ssub.s32 %s23, 1
      %s29 = ssub.s32 %s23, 2
      %s36 = sadd.s32 1, %s31
      %p37 = scmp.ge.s32.totalorder %s36, 1
      %s38 = scalar_select %p37, 0, %s36
      %s39 = sadd.s32 1, %s30
      %s40 = scalar_select %p37, %s39, %s30
      %p41 = scmp.ge.s32.totalorder %s40, 2
      %s42 = scalar_select %p41, 0, %s40
      %s43 = ssub.s32 %s30, %s42
      %s44 = ssub.s32 %s31, %s38
      %s45 = sor.u32 %s43, %s44
      %p46 = scmp.eq.s32.totalorder %s45, 0
      %s48 = sadd.s32 %s47, 1
      %s49 = scalar_select %p46, %s47, %s48
      %p52 = pneg %p46
      %p53 = scmp.eq.s32.totalorder %s23, 1
      %p54 = por %p52, %p53
      %p55 = scmp.ne.s32.totalorder %s47, %s50
      %p56 = scmp.eq.s32.totalorder %s23, 0
      %p57 = por %p55, %p56
      %p58 = scmp.ne.s32.totalorder %s47, %s50
      %p59 = scmp.eq.s32.totalorder %s28, 1
      %p60 = por %p58, %p59
      %p61 = scmp.ne.s32.totalorder %s50, %s51
      %p62 = scmp.eq.s32.totalorder %s28, 0
      %p63 = por %p61, %p62
      %p64 = scmp.ne.s32.totalorder %s50, %s51
      %p65 = scmp.eq.s32.totalorder %s29, 1
      %p66 = por %p64, %p65
      %p68 = scmp.ne.s32.totalorder %s51, %s67
      %p69 = scmp.eq.s32.totalorder %s29, 0
      %p70 = por %p68, %p69
      %s72 = sadd.s32 %s71, 1
      %p75 = scmp.eq.s32.totalorder %s23, 1
      %p76 = scmp.ne.s32.totalorder %s71, %s73
      %p77 = scmp.eq.s32.totalorder %s23, 0
      %p78 = por %p76, %p77
      %p79 = scmp.ne.s32.totalorder %s71, %s73
      %p80 = scmp.eq.s32.totalorder %s28, 1
      %p81 = por %p79, %p80
      %p82 = scmp.ne.s32.totalorder %s73, %s74
      %p83 = scmp.eq.s32.totalorder %s28, 0
      %p84 = por %p82, %p83
      %p85 = scmp.ne.s32.totalorder %s73, %s74
      %p86 = scmp.eq.s32.totalorder %s29, 1
      %p87 = por %p85, %p86
      %p89 = scmp.ne.s32.totalorder %s74, %s88
      %p90 = scmp.eq.s32.totalorder %s29, 0
      %p91 = por %p89, %p90
      %s93 = sadd.s32 %s92, 1
      %p96 = scmp.eq.s32.totalorder %s23, 1
      %p97 = scmp.ne.s32.totalorder %s92, %s94
      %p98 = scmp.eq.s32.totalorder %s23, 0
      %p99 = por %p97, %p98
      %p100 = scmp.ne.s32.totalorder %s92, %s94
      %p101 = scmp.eq.s32.totalorder %s28, 1
      %p102 = por %p100, %p101
      %p103 = scmp.ne.s32.totalorder %s94, %s95
      %p104 = scmp.eq.s32.totalorder %s28, 0
      %p105 = por %p103, %p104
      %p106 = scmp.ne.s32.totalorder %s94, %s95
      %p107 = scmp.eq.s32.totalorder %s29, 1
      %p108 = por %p106, %p107
      %p110 = scmp.ne.s32.totalorder %s95, %s109
      %p111 = scmp.eq.s32.totalorder %s29, 0
      %p112 = por %p110, %p111
      %s114 = sadd.s32 %s113, 1
      %p117 = scmp.eq.s32.totalorder %s23, 1
      %p118 = scmp.ne.s32.totalorder %s113, %s115
      %p119 = scmp.eq.s32.totalorder %s23, 0
      %p120 = por %p118, %p119
      %p121 = scmp.ne.s32.totalorder %s113, %s115
      %p122 = scmp.eq.s32.totalorder %s28, 1
      %p123 = por %p121, %p122
      %p124 = scmp.ne.s32.totalorder %s115, %s116
      %p125 = scmp.eq.s32.totalorder %s28, 0
      %p126 = por %p124, %p125
      %p127 = scmp.ne.s32.totalorder %s115, %s116
      %p128 = scmp.eq.s32.totalorder %s29, 1
      %p129 = por %p127, %p128
      %p131 = scmp.ne.s32.totalorder %s116, %s130
      %p132 = scmp.eq.s32.totalorder %s29, 0
      %p133 = por %p131, %p132
      %s135 = sadd.s32 %s134, 1
      %p138 = scmp.eq.s32.totalorder %s23, 1
      %p139 = scmp.ne.s32.totalorder %s134, %s136
      %p140 = scmp.eq.s32.totalorder %s23, 0
      %p141 = por %p139, %p140
      %p142 = scmp.ne.s32.totalorder %s134, %s136
      %p143 = scmp.eq.s32.totalorder %s28, 1
      %p144 = por %p142, %p143
      %p145 = scmp.ne.s32.totalorder %s136, %s137
      %p146 = scmp.eq.s32.totalorder %s28, 0
      %p147 = por %p145, %p146
      %p148 = scmp.ne.s32.totalorder %s136, %s137
      %p149 = scmp.eq.s32.totalorder %s29, 1
      %p150 = por %p148, %p149
      %p152 = scmp.ne.s32.totalorder %s137, %s151
      %p153 = scmp.eq.s32.totalorder %s29, 0
      %p154 = por %p152, %p153
      %s156 = sadd.s32 %s155, 1
      %p159 = scmp.eq.s32.totalorder %s23, 1
      %p160 = scmp.ne.s32.totalorder %s155, %s157
      %p161 = scmp.eq.s32.totalorder %s23, 0
      %p162 = por %p160, %p161
      %p163 = scmp.ne.s32.totalorder %s155, %s157
      %p164 = scmp.eq.s32.totalorder %s28, 1
      %p165 = por %p163, %p164
      %p166 = scmp.ne.s32.totalorder %s157, %s158
      %p167 = scmp.eq.s32.totalorder %s28, 0
      %p168 = por %p166, %p167
      %p169 = scmp.ne.s32.totalorder %s157, %s158
      %p170 = scmp.eq.s32.totalorder %s29, 1
      %p171 = por %p169, %p170
      %p173 = scmp.ne.s32.totalorder %s158, %s172
      %p174 = scmp.eq.s32.totalorder %s29, 0
      %p175 = por %p173, %p174
      %s177 = sadd.s32 %s176, 1
      %p180 = scmp.eq.s32.totalorder %s23, 1
      %p181 = scmp.ne.s32.totalorder %s176, %s178
      %p182 = scmp.eq.s32.totalorder %s23, 0
      %p183 = por %p181, %p182
      %p184 = scmp.ne.s32.totalorder %s176, %s178
      %p185 = scmp.eq.s32.totalorder %s28, 1
      %p186 = por %p184, %p185
      %p187 = scmp.ne.s32.totalorder %s178, %s179
      %p188 = scmp.eq.s32.totalorder %s28, 0
      %p189 = por %p187, %p188
      %p190 = scmp.ne.s32.totalorder %s178, %s179
      %p191 = scmp.eq.s32.totalorder %s29, 1
      %p192 = por %p190, %p191
      %p194 = scmp.ne.s32.totalorder %s179, %s193
      %p195 = scmp.eq.s32.totalorder %s29, 0
      %p196 = por %p194, %p195
      %s197 = ssub.s32 %s30, %s42
      %s198 = ssub.s32 %s31, %s38
      %s199 = sor.u32 %s197, %s198
      %p200 = scmp.eq.s32.totalorder %s199, 0
      %s202 = sadd.s32 %s201, 1
      %s203 = scalar_select %p200, %s201, %s202
      %p206 = pneg %p200
      %p207 = scmp.eq.s32.totalorder %s23, 1
      %p208 = por %p206, %p207
      %p209 = scmp.ne.s32.totalorder %s201, %s204
      %p210 = scmp.eq.s32.totalorder %s23, 0
      %p211 = por %p209, %p210
      %p212 = scmp.ne.s32.totalorder %s201, %s204
      %p213 = scmp.eq.s32.totalorder %s28, 1
      %p214 = por %p212, %p213
      %p215 = scmp.ne.s32.totalorder %s204, %s205
      %p216 = scmp.eq.s32.totalorder %s28, 0
      %p217 = por %p215, %p216
      %p218 = scmp.ne.s32.totalorder %s204, %s205
      %p219 = scmp.eq.s32.totalorder %s29, 1
      %p220 = por %p218, %p219
      %p222 = scmp.ne.s32.totalorder %s205, %s221
      %p223 = scmp.eq.s32.totalorder %s29, 0
      %p224 = por %p222, %p223
      %p225 = scmp.le.s32.totalorder 1, %s23
      %p226 = scmp.lt.s32.totalorder %s23, 3
      %p227 = pnand %p225, %p226
      %p228 = pneg %p227
      // Predicated region
      $region9: #{tpu_custom_call.1} parent=5 // pred_check
        _
      $region10: #{tpu_custom_call.1} parent=5 // pred_check_branch
        %230 = sbr.rel (%p227) target = $region12
      $region11: #{tpu_custom_call.1} parent=5 // pred_region
        %s231 = ssub.s32 %s23, 1
        // Predicated region
        $region13: #{tpu_custom_call.1} parent=11 // pred_check
          %p232 = pneg %p84
        $region14: #{tpu_custom_call.1} parent=11 // pred_check_branch
          %234 = sbr.rel (%p232) target = $region16
        $region15: #{tpu_custom_call.1} parent=11 // pred_region
          %s236 = ssub.s32 64, 64
          %237 = vsyncadd [#allocation5], %s236
          %240 = dma.hbm_to_smem %s1, 64, [#allocation7], [#allocation5]
        $region16: #{tpu_custom_call.1} parent=11 // pred_fallthru
          _
        // Predicated region
        $region17: #{tpu_custom_call.1} parent=11 // pred_check
          %p241 = pneg %p105
        $region18: #{tpu_custom_call.1} parent=11 // pred_check_branch
          %243 = sbr.rel (%p241) target = $region20
        $region19: #{tpu_custom_call.1} parent=11 // pred_region
          %s245 = ssub.s32 16, 16
          %246 = vsyncadd [#allocation6], %s245
          %s248 = sshll.u32 %s2, 4
          %s249 = int_to_ptr.vmem [resolvable:$true] %s248
          %251 = dma.vmem_to_smem %s249, 16, [#allocation8], [#allocation6]
        $region20: #{tpu_custom_call.1} parent=11 // pred_fallthru
          _
        // Predicated region
        $region21: #{tpu_custom_call.1} parent=11 // pred_check
          %p252 = pneg %p126
        $region22: #{tpu_custom_call.1} parent=11 // pred_check_branch
          %254 = sbr.rel (%p252) target = $region24
        $region23: #{tpu_custom_call.1} parent=11 // pred_region
          %s256 = ssub.s32 64, 64
          %257 = vsyncadd [#allocation10], %s256
          %s259 = sshll.u32 %s3, 4
          %s260 = int_to_ptr.vmem [resolvable:$true] %s259
          %262 = dma.vmem_to_smem %s260, 64, [#allocation9], [#allocation10]
        $region24: #{tpu_custom_call.1} parent=11 // pred_fallthru
          _
        // Predicated region
        $region25: #{tpu_custom_call.1} parent=11 // pred_check
          %p263 = pneg %p147
        $region26: #{tpu_custom_call.1} parent=11 // pred_check_branch
          %265 = sbr.rel (%p263) target = $region28
        $region27: #{tpu_custom_call.1} parent=11 // pred_region
          %s267 = ssub.s32 16, 16
          %268 = vsyncadd [#allocation12], %s267
          %271 = dma.hbm_to_smem %s4, 16, [#allocation11], [#allocation12]
        $region28: #{tpu_custom_call.1} parent=11 // pred_fallthru
          _
        // Predicated region
        $region29: #{tpu_custom_call.1} parent=11 // pred_check
          %p272 = pneg %p168
        $region30: #{tpu_custom_call.1} parent=11 // pred_check_branch
          %274 = sbr.rel (%p272) target = $region32
        $region31: #{tpu_custom_call.1} parent=11 // pred_region
          %s276 = ssub.s32 64, 64
          %277 = vsyncadd [#allocation10], %s276
          %s279 = sshll.u32 %s5, 4
          %s280 = int_to_ptr.vmem [resolvable:$true] %s279
          %282 = dma.vmem_to_smem %s280, 64, [#allocation13], [#allocation10]
        $region32: #{tpu_custom_call.1} parent=11 // pred_fallthru
          _
        // Predicated region
        $region33: #{tpu_custom_call.1} parent=11 // pred_check
          %p283 = pneg %p189
        $region34: #{tpu_custom_call.1} parent=11 // pred_check_branch
          %285 = sbr.rel (%p283) target = $region36
        $region35: #{tpu_custom_call.1} parent=11 // pred_region
          %s287 = ssub.s32 64, 64
          %288 = vsyncadd [#allocation12], %s287
          %291 = dma.hbm_to_smem %s6, 64, [#allocation14], [#allocation12]
        $region36: #{tpu_custom_call.1} parent=11 // pred_fallthru
          _
      $region12: #{tpu_custom_call.1} parent=5 // pred_fallthru
        _
      %p292 = scmp.lt.s32.totalorder %s23, 2
      // Predicated region
      $region37: #{tpu_custom_call.1} parent=5 // pred_check
        %p293 = pneg %p292
      $region38: #{tpu_custom_call.1} parent=5 // pred_check_branch
        %295 = sbr.rel (%p293) target = $region40
      $region39: #{tpu_custom_call.1} parent=5 // pred_region
        // Predicated region
        $region41: #{tpu_custom_call.1} parent=39 // pred_check
          %p296 = pneg %p57
        $region42: #{tpu_custom_call.1} parent=39 // pred_check_branch
          %298 = sbr.rel (%p296) target = $region44
        $region43: #{tpu_custom_call.1} parent=39 // pred_region
          %s299 = sand.u32 %s47, 1
          %s300 = scalar_lea.sflag [#allocation3], %s299
          %s301 = sand.u32 %s47, 1
          %s302 = smul.addr %s301, 4
          %s303 = scalar_lea.vmem [#allocation2], %s302
          %s305 = ssub.s32 64, 64
          %306 = vsyncadd %s300, %s305
          %s307 = smul.addr %s30, 4
          %s308 = sadd.s32 %s31, %s307
          %s309 = smul.addr %s308, 16
          %s310 = scalar_lea.hbm %s0, %s309
          %s311 = sshll.u32 %s303, 4
          %s312 = int_to_ptr.vmem [resolvable:$true] %s311
          %317 = dma.hbm_to_vmem [thread:$0]  %s310, 64, %s312, %s300, 16, 16, 1
        $region44: #{tpu_custom_call.1} parent=39 // pred_fallthru
          _
      $region40: #{tpu_custom_call.1} parent=5 // pred_fallthru
        _
      %p318 = scmp.le.s32.totalorder 1, %s23
      %p319 = scmp.lt.s32.totalorder %s23, 3
      %p320 = pnand %p318, %p319
      %p321 = pneg %p320
      // Predicated region
      $region45: #{tpu_custom_call.1} parent=5 // pred_check
        _
      $region46: #{tpu_custom_call.1} parent=5 // pred_check_branch
        %323 = sbr.rel (%p320) target = $region48
      $region47: #{tpu_custom_call.1} parent=5 // pred_region
        %s324 = ssub.s32 %s23, 1
        %s325 = sand.u32 %s50, 1
        %s326 = scalar_lea.sflag [#allocation3], %s325
        %s327 = sand.u32 %s50, 1
        %s328 = smul.addr %s327, 4
        %s329 = scalar_lea.vmem [#allocation2], %s328
        // Predicated region
        $region49: #{tpu_custom_call.1} parent=47 // pred_check
          %p330 = pneg %p63
        $region50: #{tpu_custom_call.1} parent=47 // pred_check_branch
          %332 = sbr.rel (%p330) target = $region52
        $region51: #{tpu_custom_call.1} parent=47 // pred_region
          %333 = dma.done %s326, 64
        $region52: #{tpu_custom_call.1} parent=47 // pred_fallthru
          _
        // Predicated region
        $region53: #{tpu_custom_call.1} parent=47 // pred_check
          %p334 = pneg %p84
        $region54: #{tpu_custom_call.1} parent=47 // pred_check_branch
          %336 = sbr.rel (%p334) target = $region56
        $region55: #{tpu_custom_call.1} parent=47 // pred_region
          %337 = dma.done [#allocation5], 64
        $region56: #{tpu_custom_call.1} parent=47 // pred_fallthru
          _
        // Predicated region
        $region57: #{tpu_custom_call.1} parent=47 // pred_check
          %p338 = pneg %p105
        $region58: #{tpu_custom_call.1} parent=47 // pred_check_branch
          %340 = sbr.rel (%p338) target = $region60
        $region59: #{tpu_custom_call.1} parent=47 // pred_region
          %341 = dma.done [#allocation6], 16
        $region60: #{tpu_custom_call.1} parent=47 // pred_fallthru
          _
        // Predicated region
        $region61: #{tpu_custom_call.1} parent=47 // pred_check
          %p342 = pneg %p126
        $region62: #{tpu_custom_call.1} parent=47 // pred_check_branch
          %344 = sbr.rel (%p342) target = $region64
        $region63: #{tpu_custom_call.1} parent=47 // pred_region
          %345 = dma.done [#allocation10], 64
        $region64: #{tpu_custom_call.1} parent=47 // pred_fallthru
          _
        // Predicated region
        $region65: #{tpu_custom_call.1} parent=47 // pred_check
          %p346 = pneg %p147
        $region66: #{tpu_custom_call.1} parent=47 // pred_check_branch
          %348 = sbr.rel (%p346) target = $region68
        $region67: #{tpu_custom_call.1} parent=47 // pred_region
          %349 = dma.done [#allocation12], 16
        $region68: #{tpu_custom_call.1} parent=47 // pred_fallthru
          _
        // Predicated region
        $region69: #{tpu_custom_call.1} parent=47 // pred_check
          %p350 = pneg %p168
        $region70: #{tpu_custom_call.1} parent=47 // pred_check_branch
          %352 = sbr.rel (%p350) target = $region72
        $region71: #{tpu_custom_call.1} parent=47 // pred_region
          %353 = dma.done [#allocation10], 64
        $region72: #{tpu_custom_call.1} parent=47 // pred_fallthru
          _
        // Predicated region
        $region73: #{tpu_custom_call.1} parent=47 // pred_check
          %p354 = pneg %p189
        $region74: #{tpu_custom_call.1} parent=47 // pred_check_branch
          %356 = sbr.rel (%p354) target = $region76
        $region75: #{tpu_custom_call.1} parent=47 // pred_region
          %357 = dma.done [#allocation12], 64
        $region76: #{tpu_custom_call.1} parent=47 // pred_fallthru
          _
        %358 = sfence
        %s359 = sand.u32 %s50, 1
        %s360 = scalar_lea.sflag [#allocation3], %s359
        %s361 = sand.u32 %s50, 1
        %s362 = smul.addr %s361, 4
        %s363 = scalar_lea.vmem [#allocation2], %s362
        %p364 = pneg %p63
        %p365 = pneg %p60
        %p366 = pneg %p84
        %p367 = pneg %p81
        %p368 = pneg %p105
        %p369 = pneg %p102
        %p370 = pneg %p126
        %p371 = pneg %p123
        %p372 = pneg %p147
        %p373 = pneg %p144
        %p374 = pneg %p168
        %p375 = pneg %p165
        %p376 = pneg %p189
        %p377 = pneg %p186
        %p378 = pneg %p217
        %p379 = pneg %p214
        %s380 = sand.u32 %s204, 1
        %s381 = scalar_lea.sflag [#allocation4], %s380
        %s382 = sand.u32 %s204, 1
        %s383 = smul.addr %s382, 6
        %s384 = scalar_lea.vmem [#allocation15], %s383
        %v385 = vld [vmem:[%s329] sm:$0x1]
        %v386 = vunpack.c.l.bf16 %v385
        %s387 = scalar_lea.vmem %s329, 1 [#allocation2]
        %v388 = vld [vmem:[%s387] sm:$0x1]
        %v389 = vunpack.c.l.bf16 %v388
        %s390 = scalar_lea.vmem %s329, 2 [#allocation2]
        %v391 = vld [vmem:[%s390] sm:$0x1]
        %v392 = vunpack.c.l.bf16 %v391
        %s393 = scalar_lea.vmem %s329, 3 [#allocation2]
        %v394 = vld [vmem:[%s393] sm:$0x1]
        %v395 = vunpack.c.l.bf16 %v394
        %s396 = sld [smem:[#allocation7]]
        %v397 = vstv %s396
        %v398 = vmul.f32 %v386, %v397
        %s399 = sld [smem:[#allocation7 + $0x80]]
        %v400 = vstv %s399
        %v401 = vmul.f32 %v389, %v400
        %v402 = vadd.f32 %v398, %v401
        %s403 = sld [smem:[#allocation7 + $0x100]]
        %v404 = vstv %s403
        %v405 = vmul.f32 %v392, %v404
        %v406 = vadd.f32 %v402, %v405
        %s407 = sld [smem:[#allocation7 + $0x180]]
        %v408 = vstv %s407
        %v409 = vmul.f32 %v395, %v408
        %v410 = vadd.f32 %v406, %v409
        %s411 = sld [smem:[#allocation8]]
        %v412 = vstv %s411
        %v413 = vadd.f32 %v410, %v412
        %v414 = vmax.f32 %v413, 0.0
        %s415 = sld [smem:[#allocation7 + $0x1]]
        %v416 = vstv %s415
        %v417 = vmul.f32 %v386, %v416
        %s418 = sld [smem:[#allocation7 + $0x81]]
        %v419 = vstv %s418
        %v420 = vmul.f32 %v389, %v419
        %v421 = vadd.f32 %v417, %v420
        %s422 = sld [smem:[#allocation7 + $0x101]]
        %v423 = vstv %s422
        %v424 = vmul.f32 %v392, %v423
        %v425 = vadd.f32 %v421, %v424
        %s426 = sld [smem:[#allocation7 + $0x181]]
        %v427 = vstv %s426
        %v428 = vmul.f32 %v395, %v427
        %v429 = vadd.f32 %v425, %v428
        %s430 = sld [smem:[#allocation8 + $0x1]]
        %v431 = vstv %s430
        %v432 = vadd.f32 %v429, %v431
        %v433 = vmax.f32 %v432, 0.0
        %s434 = sld [smem:[#allocation7 + $0x2]]
        %v435 = vstv %s434
        %v436 = vmul.f32 %v386, %v435
        %s437 = sld [smem:[#allocation7 + $0x82]]
        %v438 = vstv %s437
        %v439 = vmul.f32 %v389, %v438
        %v440 = vadd.f32 %v436, %v439
        %s441 = sld [smem:[#allocation7 + $0x102]]
        %v442 = vstv %s441
        %v443 = vmul.f32 %v392, %v442
        %v444 = vadd.f32 %v440, %v443
        %s445 = sld [smem:[#allocation7 + $0x182]]
        %v446 = vstv %s445
        %v447 = vmul.f32 %v395, %v446
        %v448 = vadd.f32 %v444, %v447
        %s449 = sld [smem:[#allocation8 + $0x2]]
        %v450 = vstv %s449
        %v451 = vadd.f32 %v448, %v450
        %v452 = vmax.f32 %v451, 0.0
        %s453 = sld [smem:[#allocation7 + $0x3]]
        %v454 = vstv %s453
        %v455 = vmul.f32 %v386, %v454
        %s456 = sld [smem:[#allocation7 + $0x83]]
        %v457 = vstv %s456
        %v458 = vmul.f32 %v389, %v457
        %v459 = vadd.f32 %v455, %v458
        %s460 = sld [smem:[#allocation7 + $0x103]]
        %v461 = vstv %s460
        %v462 = vmul.f32 %v392, %v461
        %v463 = vadd.f32 %v459, %v462
        %s464 = sld [smem:[#allocation7 + $0x183]]
        %v465 = vstv %s464
        %v466 = vmul.f32 %v395, %v465
        %v467 = vadd.f32 %v463, %v466
        %s468 = sld [smem:[#allocation8 + $0x3]]
        %v469 = vstv %s468
        %v470 = vadd.f32 %v467, %v469
        %v471 = vmax.f32 %v470, 0.0
        %v472 = vadd.f32 %v414, %v433
        %v473 = vadd.f32 %v472, %v452
        %v474 = vadd.f32 %v473, %v471
        %v475 = vadd.f32 %v474, 1.1920929e-07
        %v476 = vrcp.pop %v475
        %v477 = vmul.f32 %v414, %v476
        %v478 = vmul.f32 %v433, %v476
        %v479 = vmul.f32 %v452, %v476
        %v480 = vmul.f32 %v471, %v476
        %s481 = sld [smem:[#allocation9]]
        %v482 = vstv %s481
        %v483 = vmul.f32 %v386, %v482
        %s484 = sld [smem:[#allocation9 + $0x80]]
        %v485 = vstv %s484
        %v486 = vmul.f32 %v389, %v485
        %v487 = vadd.f32 %v483, %v486
        %s488 = sld [smem:[#allocation9 + $0x100]]
        %v489 = vstv %s488
        %v490 = vmul.f32 %v392, %v489
        %v491 = vadd.f32 %v487, %v490
        %s492 = sld [smem:[#allocation9 + $0x180]]
        %v493 = vstv %s492
        %v494 = vmul.f32 %v395, %v493
        %v495 = vadd.f32 %v491, %v494
        %s496 = sld [smem:[#allocation11]]
        %v497 = vstv %s496
        %v498 = vadd.f32 %v495, %v497
        %v499 = vmax.f32 %v498, 0.0
        %s500 = sld [smem:[#allocation9 + $0x1]]
        %v501 = vstv %s500
        %v502 = vmul.f32 %v386, %v501
        %s503 = sld [smem:[#allocation9 + $0x81]]
        %v504 = vstv %s503
        %v505 = vmul.f32 %v389, %v504
        %v506 = vadd.f32 %v502, %v505
        %s507 = sld [smem:[#allocation9 + $0x101]]
        %v508 = vstv %s507
        %v509 = vmul.f32 %v392, %v508
        %v510 = vadd.f32 %v506, %v509
        %s511 = sld [smem:[#allocation9 + $0x181]]
        %v512 = vstv %s511
        %v513 = vmul.f32 %v395, %v512
        %v514 = vadd.f32 %v510, %v513
        %s515 = sld [smem:[#allocation11 + $0x1]]
        %v516 = vstv %s515
        %v517 = vadd.f32 %v514, %v516
        %v518 = vmax.f32 %v517, 0.0
        %s519 = sld [smem:[#allocation9 + $0x2]]
        %v520 = vstv %s519
        %v521 = vmul.f32 %v386, %v520
        %s522 = sld [smem:[#allocation9 + $0x82]]
        %v523 = vstv %s522
        %v524 = vmul.f32 %v389, %v523
        %v525 = vadd.f32 %v521, %v524
        %s526 = sld [smem:[#allocation9 + $0x102]]
        %v527 = vstv %s526
        %v528 = vmul.f32 %v392, %v527
        %v529 = vadd.f32 %v525, %v528
        %s530 = sld [smem:[#allocation9 + $0x182]]
        %v531 = vstv %s530
        %v532 = vmul.f32 %v395, %v531
        %v533 = vadd.f32 %v529, %v532
        %s534 = sld [smem:[#allocation11 + $0x2]]
        %v535 = vstv %s534
        %v536 = vadd.f32 %v533, %v535
        %v537 = vmax.f32 %v536, 0.0
        %s538 = sld [smem:[#allocation9 + $0x3]]
        %v539 = vstv %s538
        %v540 = vmul.f32 %v386, %v539
        %s541 = sld [smem:[#allocation9 + $0x83]]
        %v542 = vstv %s541
        %v543 = vmul.f32 %v389, %v542
        %v544 = vadd.f32 %v540, %v543
        %s545 = sld [smem:[#allocation9 + $0x103]]
        %v546 = vstv %s545
        %v547 = vmul.f32 %v392, %v546
        %v548 = vadd.f32 %v544, %v547
        %s549 = sld [smem:[#allocation9 + $0x183]]
        %v550 = vstv %s549
        %v551 = vmul.f32 %v395, %v550
        %v552 = vadd.f32 %v548, %v551
        %s553 = sld [smem:[#allocation11 + $0x3]]
        %v554 = vstv %s553
        %v555 = vadd.f32 %v552, %v554
        %v556 = vmax.f32 %v555, 0.0
        %v557 = vadd.f32 %v499, %v518
        %v558 = vadd.f32 %v557, %v537
        %v559 = vadd.f32 %v558, %v556
        %v560 = vadd.f32 %v559, 1.1920929e-07
        %v561 = vrcp.pop %v560
        %v562 = vmul.f32 %v499, %v561
        %v563 = vmul.f32 %v518, %v561
        %v564 = vmul.f32 %v537, %v561
        %v565 = vmul.f32 %v556, %v561
        %s566 = sld [smem:[#allocation13]]
        %v567 = vstv %s566
        %v568 = vmul.f32 %v477, %v567
        %s569 = sld [smem:[#allocation13 + $0x80]]
        %v570 = vstv %s569
        %v571 = vmul.f32 %v478, %v570
        %v572 = vadd.f32 %v568, %v571
        %s573 = sld [smem:[#allocation13 + $0x100]]
        %v574 = vstv %s573
        %v575 = vmul.f32 %v479, %v574
        %v576 = vadd.f32 %v572, %v575
        %s577 = sld [smem:[#allocation13 + $0x180]]
        %v578 = vstv %s577
        %v579 = vmul.f32 %v480, %v578
        %v580 = vadd.f32 %v576, %v579
        %s581 = sld [smem:[#allocation13 + $0x1]]
        %v582 = vstv %s581
        %v583 = vmul.f32 %v477, %v582
        %s584 = sld [smem:[#allocation13 + $0x81]]
        %v585 = vstv %s584
        %v586 = vmul.f32 %v478, %v585
        %v587 = vadd.f32 %v583, %v586
        %s588 = sld [smem:[#allocation13 + $0x101]]
        %v589 = vstv %s588
        %v590 = vmul.f32 %v479, %v589
        %v591 = vadd.f32 %v587, %v590
        %s592 = sld [smem:[#allocation13 + $0x181]]
        %v593 = vstv %s592
        %v594 = vmul.f32 %v480, %v593
        %v595 = vadd.f32 %v591, %v594
        %s596 = sld [smem:[#allocation13 + $0x2]]
        %v597 = vstv %s596
        %v598 = vmul.f32 %v477, %v597
        %s599 = sld [smem:[#allocation13 + $0x82]]
        %v600 = vstv %s599
        %v601 = vmul.f32 %v478, %v600
        %v602 = vadd.f32 %v598, %v601
        %s603 = sld [smem:[#allocation13 + $0x102]]
        %v604 = vstv %s603
        %v605 = vmul.f32 %v479, %v604
        %v606 = vadd.f32 %v602, %v605
        %s607 = sld [smem:[#allocation13 + $0x182]]
        %v608 = vstv %s607
        %v609 = vmul.f32 %v480, %v608
        %v610 = vadd.f32 %v606, %v609
        %s611 = sld [smem:[#allocation14]]
        %v612 = vstv %s611
        %v613 = vmul.f32 %v562, %v612
        %s614 = sld [smem:[#allocation14 + $0x80]]
        %v615 = vstv %s614
        %v616 = vmul.f32 %v563, %v615
        %v617 = vadd.f32 %v613, %v616
        %s618 = sld [smem:[#allocation14 + $0x100]]
        %v619 = vstv %s618
        %v620 = vmul.f32 %v564, %v619
        %v621 = vadd.f32 %v617, %v620
        %s622 = sld [smem:[#allocation14 + $0x180]]
        %v623 = vstv %s622
        %v624 = vmul.f32 %v565, %v623
        %v625 = vadd.f32 %v621, %v624
        %s626 = sld [smem:[#allocation14 + $0x1]]
        %v627 = vstv %s626
        %v628 = vmul.f32 %v562, %v627
        %s629 = sld [smem:[#allocation14 + $0x81]]
        %v630 = vstv %s629
        %v631 = vmul.f32 %v563, %v630
        %v632 = vadd.f32 %v628, %v631
        %s633 = sld [smem:[#allocation14 + $0x101]]
        %v634 = vstv %s633
        %v635 = vmul.f32 %v564, %v634
        %v636 = vadd.f32 %v632, %v635
        %s637 = sld [smem:[#allocation14 + $0x181]]
        %v638 = vstv %s637
        %v639 = vmul.f32 %v565, %v638
        %v640 = vadd.f32 %v636, %v639
        %s641 = sld [smem:[#allocation14 + $0x2]]
        %v642 = vstv %s641
        %v643 = vmul.f32 %v562, %v642
        %s644 = sld [smem:[#allocation14 + $0x82]]
        %v645 = vstv %s644
        %v646 = vmul.f32 %v563, %v645
        %v647 = vadd.f32 %v643, %v646
        %s648 = sld [smem:[#allocation14 + $0x102]]
        %v649 = vstv %s648
        %v650 = vmul.f32 %v564, %v649
        %v651 = vadd.f32 %v647, %v650
        %s652 = sld [smem:[#allocation14 + $0x182]]
        %v653 = vstv %s652
        %v654 = vmul.f32 %v565, %v653
        %v655 = vadd.f32 %v651, %v654
        %s656 = sld [smem:[#allocation14 + $0x3]]
        %v657 = vstv %s656
        %v658 = vmul.f32 %v562, %v657
        %s659 = sld [smem:[#allocation14 + $0x83]]
        %v660 = vstv %s659
        %v661 = vmul.f32 %v563, %v660
        %v662 = vadd.f32 %v658, %v661
        %s663 = sld [smem:[#allocation14 + $0x103]]
        %v664 = vstv %s663
        %v665 = vmul.f32 %v564, %v664
        %v666 = vadd.f32 %v662, %v665
        %s667 = sld [smem:[#allocation14 + $0x183]]
        %v668 = vstv %s667
        %v669 = vmul.f32 %v565, %v668
        %v670 = vadd.f32 %v666, %v669
        %s671 = sld [smem:[#allocation14 + $0x4]]
        %v672 = vstv %s671
        %v673 = vmul.f32 %v562, %v672
        %s674 = sld [smem:[#allocation14 + $0x84]]
        %v675 = vstv %s674
        %v676 = vmul.f32 %v563, %v675
        %v677 = vadd.f32 %v673, %v676
        %s678 = sld [smem:[#allocation14 + $0x104]]
        %v679 = vstv %s678
        %v680 = vmul.f32 %v564, %v679
        %v681 = vadd.f32 %v677, %v680
        %s682 = sld [smem:[#allocation14 + $0x184]]
        %v683 = vstv %s682
        %v684 = vmul.f32 %v565, %v683
        %v685 = vadd.f32 %v681, %v684
        %s686 = sld [smem:[#allocation14 + $0x5]]
        %v687 = vstv %s686
        %v688 = vmul.f32 %v562, %v687
        %s689 = sld [smem:[#allocation14 + $0x85]]
        %v690 = vstv %s689
        %v691 = vmul.f32 %v563, %v690
        %v692 = vadd.f32 %v688, %v691
        %s693 = sld [smem:[#allocation14 + $0x105]]
        %v694 = vstv %s693
        %v695 = vmul.f32 %v564, %v694
        %v696 = vadd.f32 %v692, %v695
        %s697 = sld [smem:[#allocation14 + $0x185]]
        %v698 = vstv %s697
        %v699 = vmul.f32 %v565, %v698
        %v700 = vadd.f32 %v696, %v699
        %v701 = vand.u32 2147483647, %v580
        %v702 = vadd.f32 %v701, 1.0
        %v703 = vrcp.pop %v702
        %v704 = vmul.f32 %v580, %v703
        %v705 = vadd.f32 %v704, 1.0
        %v706 = vmul.f32 %v625, %v625
        %v707 = vmul.f32 %v670, %v670
        %v708 = vadd.f32 %v706, %v707
        %v709 = vadd.f32 %v708, 1.4210855e-14
        %v710 = vrsqrt.pop %v709
        %v711 = vadd.f32 %v705, 1.1920929e-07
        %v712 = vmul.f32 %v711, %v710
        %v713 = vmul.f32 %v625, %v712
        %v714 = vpack.c.bf16 %v713, %v713
        %715 = vst [vmem:[%s384] sm:$0x1] %v714
        %v716 = vmul.f32 %v670, %v712
        %v717 = vpack.c.bf16 %v716, %v716
        %s718 = scalar_lea.vmem %s384, 3 [#allocation15]
        %719 = vst [vmem:[%s718] sm:$0x1] %v717
        %v720 = vand.u32 2147483647, %v595
        %v721 = vadd.f32 %v720, 1.0
        %v722 = vrcp.pop %v721
        %v723 = vmul.f32 %v595, %v722
        %v724 = vadd.f32 %v723, 1.0
        %v725 = vmul.f32 %v640, %v640
        %v726 = vmul.f32 %v685, %v685
        %v727 = vadd.f32 %v725, %v726
        %v728 = vadd.f32 %v727, 1.4210855e-14
        %v729 = vrsqrt.pop %v728
        %v730 = vadd.f32 %v724, 1.1920929e-07
        %v731 = vmul.f32 %v730, %v729
        %v732 = vmul.f32 %v640, %v731
        %v733 = vpack.c.bf16 %v732, %v732
        %s734 = scalar_lea.vmem %s384, 1 [#allocation15]
        %735 = vst [vmem:[%s734] sm:$0x1] %v733
        %v736 = vmul.f32 %v685, %v731
        %v737 = vpack.c.bf16 %v736, %v736
        %s738 = scalar_lea.vmem %s384, 4 [#allocation15]
        %739 = vst [vmem:[%s738] sm:$0x1] %v737
        %v740 = vand.u32 2147483647, %v610
        %v741 = vadd.f32 %v740, 1.0
        %v742 = vrcp.pop %v741
        %v743 = vmul.f32 %v610, %v742
        %v744 = vadd.f32 %v743, 1.0
        %v745 = vmul.f32 %v655, %v655
        %v746 = vmul.f32 %v700, %v700
        %v747 = vadd.f32 %v745, %v746
        %v748 = vadd.f32 %v747, 1.4210855e-14
        %v749 = vrsqrt.pop %v748
        %v750 = vadd.f32 %v744, 1.1920929e-07
        %v751 = vmul.f32 %v750, %v749
        %v752 = vmul.f32 %v655, %v751
        %v753 = vpack.c.bf16 %v752, %v752
        %s754 = scalar_lea.vmem %s384, 2 [#allocation15]
        %755 = vst [vmem:[%s754] sm:$0x1] %v753
        %v756 = vmul.f32 %v700, %v751
        %v757 = vpack.c.bf16 %v756, %v756
        %s758 = scalar_lea.vmem %s384, 5 [#allocation15]
        %759 = vst [vmem:[%s758] sm:$0x1] %v757
        %s760 = sand.u32 %s204, 1
        %s761 = scalar_lea.sflag [#allocation4], %s760
        %s762 = sand.u32 %s204, 1
        %s763 = smul.addr %s762, 6
        %s764 = scalar_lea.vmem [#allocation15], %s763
        // Predicated region
        $region77: #{tpu_custom_call.1} parent=47 // pred_check
          %p765 = pneg %p214
        $region78: #{tpu_custom_call.1} parent=47 // pred_check_branch
          %767 = sbr.rel (%p765) target = $region80
        $region79: #{tpu_custom_call.1} parent=47 // pred_region
          %s769 = ssub.s32 96, 96
          %770 = vsyncadd %s761, %s769
          %s771 = smul.addr %s32, 6
          %s772 = sadd.s32 %s33, %s771
          %s773 = smul.addr %s772, 16
          %s774 = scalar_lea.hbm %s7, %s773
          %s775 = sshll.u32 %s764, 4
          %s776 = int_to_ptr.vmem [resolvable:$true] %s775
          %781 = dma.vmem_to_hbm [thread:$0]  %s776, 96, %s774, %s761, 16, 16, 1
        $region80: #{tpu_custom_call.1} parent=47 // pred_fallthru
          _
      $region48: #{tpu_custom_call.1} parent=5 // pred_fallthru
        _
      %p782 = scmp.le.s32.totalorder 2, %s23
      // Predicated region
      $region81: #{tpu_custom_call.1} parent=5 // pred_check
        %p783 = pneg %p782
      $region82: #{tpu_custom_call.1} parent=5 // pred_check_branch
        %785 = sbr.rel (%p783) target = $region84
      $region83: #{tpu_custom_call.1} parent=5 // pred_region
        %s786 = ssub.s32 %s23, 2
        // Predicated region
        $region85: #{tpu_custom_call.1} parent=83 // pred_check
          %p787 = pneg %p220
        $region86: #{tpu_custom_call.1} parent=83 // pred_check_branch
          %789 = sbr.rel (%p787) target = $region88
        $region87: #{tpu_custom_call.1} parent=83 // pred_region
          %s790 = sand.u32 %s205, 1
          %s791 = scalar_lea.sflag [#allocation4], %s790
          %s792 = sand.u32 %s205, 1
          %s793 = smul.addr %s792, 6
          %s794 = scalar_lea.vmem [#allocation15], %s793
          %795 = dma.done %s791, 96
        $region88: #{tpu_custom_call.1} parent=83 // pred_fallthru
          _
      $region84: #{tpu_custom_call.1} parent=5 // pred_fallthru
        _
    $region6: #{tpu_custom_call.1} parent=1 // loop_footer
      %s27 = sadd.s32 1, %s23
    $region7: #{tpu_custom_call.1} parent=1 // loop_footer_branch
      %22 = sbr.rel target = $region3
    $region8: #{tpu_custom_call.1} parent=1 // loop_exit
      _
    %796 = vsyncpa [#allocation3], 1
    %s797 = scalar_lea.sflag [#allocation3], 1
    %798 = vsyncpa %s797, 1
    %799 = vsyncpa [#allocation4], 1
    %s800 = scalar_lea.sflag [#allocation4], 1
    %801 = vsyncpa %s800, 1
    %802 = vsyncpa [#allocation5], 1
    %s803 = scalar_lea.sflag [#allocation5], 1
    %804 = vsyncpa %s803, 1
    %805 = vsyncpa [#allocation12], 1
    %806 = vsyncpa [#allocation6], 1
    %s807 = scalar_lea.sflag [#allocation6], 1
    %808 = vsyncpa %s807, 1
    %809 = vsyncpa [#allocation10], 1

</llo_original>
